<compile_context>
chip_gen: v7x
topology: tpu7x:2x2x1
jax: 0.10.0
libtpu: 0.0.40
codegen_flags: <defaults>
</compile_context>

<pallas_src>
import functools

import jax
import jax.numpy as jnp
import numpy as np
from jax import lax
from jax.experimental import pallas as pl
from jax.experimental.pallas import tpu as pltpu

LANE = 128
_ACC_ROWS = 8   # rows 0..5 used: [bce_noobj, n_noobj, n_obj, obj_se, box_se, ce]


# ----------------------------- Pallas kernel ------------------------------ #
def _yolo_loss_kernel(anc_ref, pred_ref, tgt_ref, out_ref, acc_ref, *,
                      rows, tiles_per_core, m_per_anchor, num_anchors,
                      num_classes, m_valid):
    c = pl.program_id(0)            # core-split axis ("parallel")
    t = pl.program_id(1)            # tile within this core ("arbitrary")
    g = c * tiles_per_core + t      # global tile index

    @pl.when(t == 0)
    def _():
        acc_ref[...] = jnp.zeros_like(acc_ref)

    # Global flat cell index of every element of this (rows, 128) tile, plus a
    # validity mask that neutralizes the padded ragged tail (idx >= M).
    idx = (g * (rows * LANE)
           + lax.broadcasted_iota(jnp.int32, (rows, LANE), 0) * LANE
           + lax.broadcasted_iota(jnp.int32, (rows, LANE), 1))
    valid = idx < m_valid

    # Per-cell anchor (w, h), selected from the tiny (A, 2) SMEM table.
    aw = jnp.full((rows, LANE), anc_ref[0, 0], jnp.float32)
    ah = jnp.full((rows, LANE), anc_ref[0, 1], jnp.float32)
    for a in range(1, num_anchors):
        sel = idx >= a * m_per_anchor
        aw = jnp.where(sel, anc_ref[a, 0], aw)
        ah = jnp.where(sel, anc_ref[a, 1], ah)

    t0 = tgt_ref[0].astype(jnp.float32)
    obj_m = valid & (t0 == 1.0)
    noobj_m = valid & (t0 == 0.0)

    # --- no-object loss: BCEWithLogits(p0, 0) == softplus(p0) ----------------
    p0 = pred_ref[0].astype(jnp.float32)
    e = jnp.exp(-jnp.abs(p0))                    # shared with sigmoid(p0)
    bce_noobj = jnp.where(noobj_m, jnp.maximum(p0, 0.0) + jnp.log1p(e), 0.0)

    # --- object loss: (sigmoid(p0) - IoU * t0)^2 over obj cells --------------
    inv_1pe = pl.reciprocal(1.0 + e, approx=True)
    sig_p0 = jnp.where(p0 >= 0.0, inv_1pe, e * inv_1pe)

    sig_x = jax.nn.sigmoid(pred_ref[1].astype(jnp.float32))
    sig_y = jax.nn.sigmoid(pred_ref[2].astype(jnp.float32))
    pw = pred_ref[3].astype(jnp.float32)
    ph = pred_ref[4].astype(jnp.float32)
    b1w = jnp.exp(pw) * aw
    b1h = jnp.exp(ph) * ah

    b2x = tgt_ref[1].astype(jnp.float32)
    b2y = tgt_ref[2].astype(jnp.float32)
    b2w = tgt_ref[3].astype(jnp.float32)
    b2h = tgt_ref[4].astype(jnp.float32)

    b1x1 = sig_x - 0.5 * b1w
    b1x2 = sig_x + 0.5 * b1w
    b1y1 = sig_y - 0.5 * b1h
    b1y2 = sig_y + 0.5 * b1h
    b2x1 = b2x - 0.5 * b2w
    b2x2 = b2x + 0.5 * b2w
    b2y1 = b2y - 0.5 * b2h
    b2y2 = b2y + 0.5 * b2h

    inter = (jnp.maximum(jnp.minimum(b1x2, b2x2) - jnp.maximum(b1x1, b2x1), 0.0)
             * jnp.maximum(jnp.minimum(b1y2, b2y2) - jnp.maximum(b1y1, b2y1), 0.0))
    area1 = jnp.abs((b1x2 - b1x1) * (b1y2 - b1y1))
    area2 = jnp.abs((b2x2 - b2x1) * (b2y2 - b2y1))
    ious = inter * pl.reciprocal(area1 + area2 - inter + 1e-6, approx=True)
    obj_se = jnp.where(obj_m, (sig_p0 - ious * t0) ** 2, 0.0)

    # --- box-coordinate MSE terms --------------------------------------------
    tw_log = jnp.log(1e-16 + b2w / aw)
    th_log = jnp.log(1e-16 + b2h / ah)
    d_box = ((sig_x - b2x) ** 2 + (sig_y - b2y) ** 2
             + (pw - tw_log) ** 2 + (ph - th_log) ** 2)
    box_se = jnp.where(obj_m, d_box, 0.0)

    # --- class cross-entropy: per-class planes, nothing big kept live --------
    label = tgt_ref[5].astype(jnp.int32)
    mx = pred_ref[5].astype(jnp.float32)
    for cc in range(1, num_classes):
        mx = jnp.maximum(mx, pred_ref[5 + cc].astype(jnp.float32))
    esum = jnp.zeros((rows, LANE), jnp.float32)
    picked = jnp.zeros((rows, LANE), jnp.float32)
    for cc in range(num_classes):
        logit = pred_ref[5 + cc].astype(jnp.float32)
        esum += jnp.exp(logit - mx)
        picked += jnp.where(label == cc, logit, 0.0)
    ce = jnp.where(obj_m, mx + jnp.log(esum) - picked, 0.0)

    # --- sublane-dense running accumulators ----------------------------------
    acc_ref[0] += bce_noobj
    acc_ref[1] += noobj_m.astype(jnp.float32)
    acc_ref[2] += obj_m.astype(jnp.float32)
    acc_ref[3] += obj_se
    acc_ref[4] += box_se
    acc_ref[5] += ce

    # --- once per core: fold the sublane axis, keep lane-partials ------------
    @pl.when(t == tiles_per_core - 1)
    def _():
        out_ref[...] = jnp.concatenate(
            [jnp.sum(acc_ref[i], axis=0, keepdims=True)
             for i in range(_ACC_ROWS)], axis=0)


# ------------------------------- wrapper ----------------------------------- #
def yolo_loss(pred, target, anchors, *, tile_m=4096):
    """pred: (N, A, S, S, 5+C); target: (N, A, S, S, 6); anchors: (A, 2)."""
    N, A, S1, S2, Cp = pred.shape
    C = Cp - 5
    M = N * A * S1 * S2
    m_per_anchor = N * S1 * S2

    # Channel-major, anchor-major layout (Cp, A*N*S*S); the flat cell axis is
    # then split into (rows, 128) so every per-field plane is sublane-dense.
    pred_t = jnp.transpose(pred, (4, 1, 0, 2, 3)).reshape(Cp, M)
    tgt_t = jnp.transpose(target, (4, 1, 0, 2, 3)).reshape(6, M)

    mr = pl.cdiv(M, LANE)                        # number of 128-lane rows
    rows_desired = max(8, (max(tile_m, 8 * LANE) // LANE // 8) * 8)
    if mr <= rows_desired:
        rows, num_tiles, ncores = mr, 1, 1
    else:
        rows = rows_desired
        num_tiles = pl.cdiv(mr, rows)
        ncores = 2                               # always feed both v7x TCs
    tiles_per_core = pl.cdiv(num_tiles, ncores)
    mr_pad = ncores * tiles_per_core * rows
    pad_cols = mr_pad * LANE - M
    if pad_cols:
        # Zero pad; padded cells are neutralized in-kernel by the idx < M mask,
        # so the pad content never matters.  The pad fuses with the transpose.
        pred_t = jnp.pad(pred_t, ((0, 0), (0, pad_cols)))
        tgt_t = jnp.pad(tgt_t, ((0, 0), (0, pad_cols)))
    pred3 = pred_t.reshape(Cp, mr_pad, LANE)     # keep input dtype (bf16 OK)
    tgt3 = tgt_t.reshape(6, mr_pad, LANE)

    kernel = functools.partial(
        _yolo_loss_kernel, rows=rows, tiles_per_core=tiles_per_core,
        m_per_anchor=m_per_anchor, num_anchors=A, num_classes=C, m_valid=M)

    partials = pl.pallas_call(
        kernel,
        out_shape=jax.ShapeDtypeStruct((ncores * _ACC_ROWS, LANE), jnp.float32),
        grid=(ncores, tiles_per_core),
        in_specs=[
            pl.BlockSpec(memory_space=pltpu.MemorySpace.SMEM),        # anchors
            pl.BlockSpec((Cp, rows, LANE),
                         lambda c, t: (0, c * tiles_per_core + t, 0)),
            pl.BlockSpec((6, rows, LANE),
                         lambda c, t: (0, c * tiles_per_core + t, 0)),
        ],
        out_specs=pl.BlockSpec((_ACC_ROWS, LANE), lambda c, t: (c, 0)),
        scratch_shapes=[pltpu.VMEM((_ACC_ROWS, rows, LANE), jnp.float32)],
        compiler_params=pltpu.CompilerParams(
            dimension_semantics=("parallel", "arbitrary")),
    )(anchors.astype(jnp.float32), pred3, tgt3)

    # final tiny combine (2*8*128 floats) done by XLA in the wrapper
    sums = partials.reshape(ncores, _ACC_ROWS, LANE).sum(axis=(0, 2))
    n_noobj = jnp.maximum(sums[1], 1.0)
    n_obj = jnp.maximum(sums[2], 1.0)
    noobj_loss = sums[0] / n_noobj
    obj_loss = sums[3] / n_obj
    box_loss = sums[4] / (4.0 * n_obj)
    class_loss = sums[5] / n_obj
    # lambda_obj=1, lambda_noobj=10, lambda_box=10, lambda_class=1
    return obj_loss + 10.0 * noobj_loss + 10.0 * box_loss + class_loss


# --------------------------- numpy reference -------------------------------- #
def reference_loss(pred, target, anchors):
    pred = np.asarray(pred, np.float64)
    tgt = np.asarray(target, np.float64)
    anc = np.asarray(anchors, np.float64).reshape(1, 3, 1, 1, 2)
    sig = lambda x: 1.0 / (1.0 + np.exp(-x))

    obj = tgt[..., 0] == 1
    noobj = tgt[..., 0] == 0

    x = pred[..., 0:1][noobj]
    y = tgt[..., 0:1][noobj]
    noobj_loss = (np.maximum(x, 0) - x * y + np.log1p(np.exp(-np.abs(x)))).mean()

    box_preds = np.concatenate(
        [sig(pred[..., 1:3]), np.exp(pred[..., 3:5]) * anc], axis=-1)
    b1, b2 = box_preds[obj], tgt[..., 1:5][obj]

    def iou(b1, b2):
        b1x1, b1y1 = b1[:, 0:1] - b1[:, 2:3] / 2, b1[:, 1:2] - b1[:, 3:4] / 2
        b1x2, b1y2 = b1[:, 0:1] + b1[:, 2:3] / 2, b1[:, 1:2] + b1[:, 3:4] / 2
        b2x1, b2y1 = b2[:, 0:1] - b2[:, 2:3] / 2, b2[:, 1:2] - b2[:, 3:4] / 2
        b2x2, b2y2 = b2[:, 0:1] + b2[:, 2:3] / 2, b2[:, 1:2] + b2[:, 3:4] / 2
        x1, y1 = np.maximum(b1x1, b2x1), np.maximum(b1y1, b2y1)
        x2, y2 = np.minimum(b1x2, b2x2), np.minimum(b1y2, b2y2)
        inter = np.clip(x2 - x1, 0, None) * np.clip(y2 - y1, 0, None)
        a1 = np.abs((b1x2 - b1x1) * (b1y2 - b1y1))
        a2 = np.abs((b2x2 - b2x1) * (b2y2 - b2y1))
        return inter / (a1 + a2 - inter + 1e-6)

    ious = iou(b1, b2)
    obj_loss = np.mean((sig(pred[..., 0:1][obj]) - ious * tgt[..., 0:1][obj]) ** 2)

    pbox = np.concatenate([sig(pred[..., 1:3]), pred[..., 3:5]], axis=-1)[obj]
    twh = np.log(1e-16 + tgt[..., 3:5] / anc)
    tbox = np.concatenate([tgt[..., 1:3], twh], axis=-1)[obj]
    box_loss = np.mean((pbox - tbox) ** 2)

    logits = pred[..., 5:][obj]
    labels = tgt[..., 5][obj].astype(np.int64)
    mx = logits.max(axis=1, keepdims=True)
    lse = mx[:, 0] + np.log(np.exp(logits - mx).sum(axis=1))
    picked = logits[np.arange(logits.shape[0]), labels]
    class_loss = np.mean(lse - picked)

    return 1 * obj_loss + 10 * noobj_loss + 10 * box_loss + 1 * class_loss


# --------------------------------- main ------------------------------------ #
if __name__ == "__main__":
    # S=26 (a real YOLO grid) with tile_m=1024 exercises: multi-tile
    # accumulation per core, the guaranteed 2-way core split, the ragged-tail
    # mask (M=4056 -> padded to 4096), and anchor boundaries inside tiles.
    N, A, S, num_classes = 2, 3, 26, 4
    Cp = 5 + num_classes

    # Deterministic "module parameters" (anchor boxes from __init__)
    anchors = jnp.array([[0.28, 0.22], [0.38, 0.48], [0.90, 0.78]], jnp.float32)

    key = jax.random.PRNGKey(0)
    k1, k2, k3, k4, k5 = jax.random.split(key, 5)
    pred = 0.5 * jax.random.normal(k5, (N, A, S, S, Cp), jnp.float32)

    objness = (jax.random.uniform(k1, (N, A, S, S, 1)) < 0.3).astype(jnp.float32)
    xy = jax.random.uniform(k2, (N, A, S, S, 2), minval=0.05, maxval=0.95)
    wh = jax.random.uniform(k3, (N, A, S, S, 2), minval=0.1, maxval=2.0)
    cls = jax.random.randint(k4, (N, A, S, S, 1), 0, num_classes).astype(jnp.float32)
    target = jnp.concatenate([objness, xy, wh, cls], axis=-1)

    loss_fn = jax.jit(functools.partial(yolo_loss, tile_m=1024))
    loss = jax.block_until_ready(loss_fn(pred, target, anchors))

    ref = reference_loss(pred, target, anchors)
    np.testing.assert_allclose(float(loss), float(ref), rtol=1e-3, atol=1e-3)

    print("KERNEL_OK")
</pallas_src>

<mosaic_0001>
module attributes {stable_mosaic.version = 11 : i64} {
  func.func @_yolo_loss_kernel(%arg0: i32, %arg1: i32, %arg2: memref<3x2xf32, #tpu.memory_space<smem>>, %arg3: memref<9x8x128xf32, #tpu.memory_space<vmem>>, %arg4: memref<6x8x128xf32, #tpu.memory_space<vmem>>, %arg5: memref<8x128xf32, #tpu.memory_space<vmem>>, %arg6: memref<8x8x128xf32, #tpu.memory_space<vmem>>) attributes {dimension_semantics = [#tpu.dimension_semantics<parallel>, #tpu.dimension_semantics<arbitrary>], iteration_bounds = array<i64: 2, 2>, scalar_prefetch = 0 : i64, scratch_operands = 1 : i64, tpu.core_type = #tpu.core_type<tc>, window_params = [{transform_indices = @transform_0, window_bounds = array<i64: 3, 2>}, {transform_indices = @transform_1, window_bounds = array<i64: 9, 8, 128>}, {transform_indices = @transform_2, window_bounds = array<i64: 6, 8, 128>}, {transform_indices = @transform_3, window_bounds = array<i64: 8, 128>}]} {
    %c2_i32 = arith.constant 2 : i32
    %0 = arith.muli %arg0, %c2_i32 : i32
    %1 = arith.addi %0, %arg1 : i32
    %c0_i32 = arith.constant 0 : i32
    %2 = arith.cmpi eq, %arg1, %c0_i32 : i32
    %3 = arith.extui %2 : i1 to i32
    %c0_i32_0 = arith.constant 0 : i32
    %4 = arith.cmpi ne, %3, %c0_i32_0 : i32
    scf.if %4 {
      %cst_131 = arith.constant 0.000000e+00 : f32
      %271 = vector.broadcast %cst_131 : f32 to vector<8x8x128xf32>
      %c0_132 = arith.constant 0 : index
      %c0_133 = arith.constant 0 : index
      %c0_134 = arith.constant 0 : index
      %272 = vector.load %arg6[%c0_132, %c0_133, %c0_134] : memref<8x8x128xf32, #tpu.memory_space<vmem>>, vector<8x8x128xf32>
      tpu.vector_store %arg6[%c0_132, %c0_133, %c0_134], %271 {strides = array<i32>} : memref<8x8x128xf32, #tpu.memory_space<vmem>>, vector<8x8x128xf32>,
    } else {
    }
    %c1024_i32 = arith.constant 1024 : i32
    %5 = arith.muli %1, %c1024_i32 : i32
    %6 = tpu.iota {dimensions = array<i32: 0>} : vector<8x128xi32>
    %c128_i32 = arith.constant 128 : i32
    %7 = vector.broadcast %c128_i32 : i32 to vector<8x128xi32>
    %8 = arith.muli %6, %7 : vector<8x128xi32>
    %9 = vector.broadcast %5 : i32 to vector<8x128xi32>
    %10 = arith.addi %9, %8 : vector<8x128xi32>
    %11 = tpu.iota {dimensions = array<i32: 1>} : vector<8x128xi32>
    %12 = arith.addi %10, %11 : vector<8x128xi32>
    %c4056_i32 = arith.constant 4056 : i32
    %13 = vector.broadcast %c4056_i32 : i32 to vector<8x128xi32>
    %14 = arith.cmpi slt, %12, %13 : vector<8x128xi32>
    %c0 = arith.constant 0 : index
    %c0_1 = arith.constant 0 : index
    %15 = memref.load %arg2[%c0, %c0_1] : memref<3x2xf32, #tpu.memory_space<smem>>
    %16 = vector.broadcast %15 : f32 to vector<8x128xf32>
    %c0_2 = arith.constant 0 : index
    %c1 = arith.constant 1 : index
    %17 = memref.load %arg2[%c0_2, %c1] : memref<3x2xf32, #tpu.memory_space<smem>>
    %18 = vector.broadcast %17 : f32 to vector<8x128xf32>
    %c1352_i32 = arith.constant 1352 : i32
    %19 = vector.broadcast %c1352_i32 : i32 to vector<8x128xi32>
    %20 = arith.cmpi sge, %12, %19 : vector<8x128xi32>
    %c1_3 = arith.constant 1 : index
    %c0_4 = arith.constant 0 : index
    %21 = memref.load %arg2[%c1_3, %c0_4] : memref<3x2xf32, #tpu.memory_space<smem>>
    %22 = vector.broadcast %21 : f32 to vector<8x128xf32>
    %23 = arith.select %20, %22, %16 : vector<8x128xi1>, vector<8x128xf32>
    %c1_5 = arith.constant 1 : index
    %c1_6 = arith.constant 1 : index
    %24 = memref.load %arg2[%c1_5, %c1_6] : memref<3x2xf32, #tpu.memory_space<smem>>
    %25 = vector.broadcast %24 : f32 to vector<8x128xf32>
    %26 = arith.select %20, %25, %18 : vector<8x128xi1>, vector<8x128xf32>
    %c2704_i32 = arith.constant 2704 : i32
    %27 = vector.broadcast %c2704_i32 : i32 to vector<8x128xi32>
    %28 = arith.cmpi sge, %12, %27 : vector<8x128xi32>
    %c2 = arith.constant 2 : index
    %c0_7 = arith.constant 0 : index
    %29 = memref.load %arg2[%c2, %c0_7] : memref<3x2xf32, #tpu.memory_space<smem>>
    %30 = vector.broadcast %29 : f32 to vector<8x128xf32>
    %31 = arith.select %28, %30, %23 : vector<8x128xi1>, vector<8x128xf32>
    %c2_8 = arith.constant 2 : index
    %c1_9 = arith.constant 1 : index
    %32 = memref.load %arg2[%c2_8, %c1_9] : memref<3x2xf32, #tpu.memory_space<smem>>
    %33 = vector.broadcast %32 : f32 to vector<8x128xf32>
    %34 = arith.select %28, %33, %26 : vector<8x128xi1>, vector<8x128xf32>
    %c0_10 = arith.constant 0 : index
    %c0_11 = arith.constant 0 : index
    %c0_12 = arith.constant 0 : index
    %35 = vector.load %arg4[%c0_10, %c0_11, %c0_12] : memref<6x8x128xf32, #tpu.memory_space<vmem>>, vector<1x8x128xf32>
    %36 = vector.shape_cast %35 : vector<1x8x128xf32> to vector<8x128xf32>
    %cst = arith.constant 1.000000e+00 : f32
    %37 = vector.broadcast %cst : f32 to vector<8x128xf32>
    %38 = arith.cmpf oeq, %36, %37 : vector<8x128xf32>
    %39 = arith.andi %14, %38 : vector<8x128xi1>
    %cst_13 = arith.constant 0.000000e+00 : f32
    %40 = vector.broadcast %cst_13 : f32 to vector<8x128xf32>
    %41 = arith.cmpf oeq, %36, %40 : vector<8x128xf32>
    %42 = arith.andi %14, %41 : vector<8x128xi1>
    %c0_14 = arith.constant 0 : index
    %c0_15 = arith.constant 0 : index
    %c0_16 = arith.constant 0 : index
    %43 = vector.load %arg3[%c0_14, %c0_15, %c0_16] : memref<9x8x128xf32, #tpu.memory_space<vmem>>, vector<1x8x128xf32>
    %44 = vector.shape_cast %43 : vector<1x8x128xf32> to vector<8x128xf32>
    %45 = math.absf %44 : vector<8x128xf32>
    %cst_17 = arith.constant 0.000000e+00 : f32
    %46 = vector.broadcast %cst_17 : f32 to vector<8x128xf32>
    %47 = arith.subf %46, %45 : vector<8x128xf32>
    %48 = math.exp %47 : vector<8x128xf32>
    %cst_18 = arith.constant 0.000000e+00 : f32
    %49 = vector.broadcast %cst_18 : f32 to vector<8x128xf32>
    %50 = arith.maximumf %44, %49 : vector<8x128xf32>
    %51 = math.log1p %48 : vector<8x128xf32>
    %52 = arith.addf %50, %51 : vector<8x128xf32>
    %cst_19 = arith.constant 0.000000e+00 : f32
    %53 = vector.broadcast %cst_19 : f32 to vector<8x128xf32>
    %54 = arith.select %42, %52, %53 : vector<8x128xi1>, vector<8x128xf32>
    %cst_20 = arith.constant 1.000000e+00 : f32
    %55 = vector.broadcast %cst_20 : f32 to vector<8x128xf32>
    %56 = arith.addf %55, %48 : vector<8x128xf32>
    %57 = tpu.reciprocal %56 {approx = true} : vector<8x128xf32> -> vector<8x128xf32>
    %cst_21 = arith.constant 0.000000e+00 : f32
    %58 = vector.broadcast %cst_21 : f32 to vector<8x128xf32>
    %59 = arith.cmpf oge, %44, %58 : vector<8x128xf32>
    %60 = arith.mulf %48, %57 : vector<8x128xf32>
    %61 = arith.select %59, %57, %60 : vector<8x128xi1>, vector<8x128xf32>
    %c1_22 = arith.constant 1 : index
    %c0_23 = arith.constant 0 : index
    %c0_24 = arith.constant 0 : index
    %62 = vector.load %arg3[%c1_22, %c0_23, %c0_24] : memref<9x8x128xf32, #tpu.memory_space<vmem>>, vector<1x8x128xf32>
    %63 = vector.shape_cast %62 : vector<1x8x128xf32> to vector<8x128xf32>
    %64 = arith.negf %63 : vector<8x128xf32>
    %65 = math.exp %64 : vector<8x128xf32>
    %cst_25 = arith.constant 1.000000e+00 : f32
    %66 = vector.broadcast %cst_25 : f32 to vector<8x128xf32>
    %67 = arith.addf %66, %65 : vector<8x128xf32>
    %68 = arith.divf %66, %67 : vector<8x128xf32>
    %c2_26 = arith.constant 2 : index
    %c0_27 = arith.constant 0 : index
    %c0_28 = arith.constant 0 : index
    %69 = vector.load %arg3[%c2_26, %c0_27, %c0_28] : memref<9x8x128xf32, #tpu.memory_space<vmem>>, vector<1x8x128xf32>
    %70 = vector.shape_cast %69 : vector<1x8x128xf32> to vector<8x128xf32>
    %71 = arith.negf %70 : vector<8x128xf32>
    %72 = math.exp %71 : vector<8x128xf32>
    %cst_29 = arith.constant 1.000000e+00 : f32
    %73 = vector.broadcast %cst_29 : f32 to vector<8x128xf32>
    %74 = arith.addf %73, %72 : vector<8x128xf32>
    %75 = arith.divf %73, %74 : vector<8x128xf32>
    %c3 = arith.constant 3 : index
    %c0_30 = arith.constant 0 : index
    %c0_31 = arith.constant 0 : index
    %76 = vector.load %arg3[%c3, %c0_30, %c0_31] : memref<9x8x128xf32, #tpu.memory_space<vmem>>, vector<1x8x128xf32>
    %77 = vector.shape_cast %76 : vector<1x8x128xf32> to vector<8x128xf32>
    %c4 = arith.constant 4 : index
    %c0_32 = arith.constant 0 : index
    %c0_33 = arith.constant 0 : index
    %78 = vector.load %arg3[%c4, %c0_32, %c0_33] : memref<9x8x128xf32, #tpu.memory_space<vmem>>, vector<1x8x128xf32>
    %79 = vector.shape_cast %78 : vector<1x8x128xf32> to vector<8x128xf32>
    %80 = math.exp %77 : vector<8x128xf32>
    %81 = arith.mulf %80, %31 : vector<8x128xf32>
    %82 = math.exp %79 : vector<8x128xf32>
    %83 = arith.mulf %82, %34 : vector<8x128xf32>
    %c1_34 = arith.constant 1 : index
    %c0_35 = arith.constant 0 : index
    %c0_36 = arith.constant 0 : index
    %84 = vector.load %arg4[%c1_34, %c0_35, %c0_36] : memref<6x8x128xf32, #tpu.memory_space<vmem>>, vector<1x8x128xf32>
    %85 = vector.shape_cast %84 : vector<1x8x128xf32> to vector<8x128xf32>
    %c2_37 = arith.constant 2 : index
    %c0_38 = arith.constant 0 : index
    %c0_39 = arith.constant 0 : index
    %86 = vector.load %arg4[%c2_37, %c0_38, %c0_39] : memref<6x8x128xf32, #tpu.memory_space<vmem>>, vector<1x8x128xf32>
    %87 = vector.shape_cast %86 : vector<1x8x128xf32> to vector<8x128xf32>
    %c3_40 = arith.constant 3 : index
    %c0_41 = arith.constant 0 : index
    %c0_42 = arith.constant 0 : index
    %88 = vector.load %arg4[%c3_40, %c0_41, %c0_42] : memref<6x8x128xf32, #tpu.memory_space<vmem>>, vector<1x8x128xf32>
    %89 = vector.shape_cast %88 : vector<1x8x128xf32> to vector<8x128xf32>
    %c4_43 = arith.constant 4 : index
    %c0_44 = arith.constant 0 : index
    %c0_45 = arith.constant 0 : index
    %90 = vector.load %arg4[%c4_43, %c0_44, %c0_45] : memref<6x8x128xf32, #tpu.memory_space<vmem>>, vector<1x8x128xf32>
    %91 = vector.shape_cast %90 : vector<1x8x128xf32> to vector<8x128xf32>
    %cst_46 = arith.constant 5.000000e-01 : f32
    %92 = vector.broadcast %cst_46 : f32 to vector<8x128xf32>
    %93 = arith.mulf %92, %81 : vector<8x128xf32>
    %94 = arith.subf %68, %93 : vector<8x128xf32>
    %cst_47 = arith.constant 5.000000e-01 : f32
    %95 = vector.broadcast %cst_47 : f32 to vector<8x128xf32>
    %96 = arith.mulf %95, %81 : vector<8x128xf32>
    %97 = arith.addf %68, %96 : vector<8x128xf32>
    %cst_48 = arith.constant 5.000000e-01 : f32
    %98 = vector.broadcast %cst_48 : f32 to vector<8x128xf32>
    %99 = arith.mulf %98, %83 : vector<8x128xf32>
    %100 = arith.subf %75, %99 : vector<8x128xf32>
    %cst_49 = arith.constant 5.000000e-01 : f32
    %101 = vector.broadcast %cst_49 : f32 to vector<8x128xf32>
    %102 = arith.mulf %101, %83 : vector<8x128xf32>
    %103 = arith.addf %75, %102 : vector<8x128xf32>
    %cst_50 = arith.constant 5.000000e-01 : f32
    %104 = vector.broadcast %cst_50 : f32 to vector<8x128xf32>
    %105 = arith.mulf %104, %89 : vector<8x128xf32>
    %106 = arith.subf %85, %105 : vector<8x128xf32>
    %cst_51 = arith.constant 5.000000e-01 : f32
    %107 = vector.broadcast %cst_51 : f32 to vector<8x128xf32>
    %108 = arith.mulf %107, %89 : vector<8x128xf32>
    %109 = arith.addf %85, %108 : vector<8x128xf32>
    %cst_52 = arith.constant 5.000000e-01 : f32
    %110 = vector.broadcast %cst_52 : f32 to vector<8x128xf32>
    %111 = arith.mulf %110, %91 : vector<8x128xf32>
    %112 = arith.subf %87, %111 : vector<8x128xf32>
    %cst_53 = arith.constant 5.000000e-01 : f32
    %113 = vector.broadcast %cst_53 : f32 to vector<8x128xf32>
    %114 = arith.mulf %113, %91 : vector<8x128xf32>
    %115 = arith.addf %87, %114 : vector<8x128xf32>
    %116 = arith.minimumf %97, %109 : vector<8x128xf32>
    %117 = arith.maximumf %94, %106 : vector<8x128xf32>
    %118 = arith.subf %116, %117 : vector<8x128xf32>
    %cst_54 = arith.constant 0.000000e+00 : f32
    %119 = vector.broadcast %cst_54 : f32 to vector<8x128xf32>
    %120 = arith.maximumf %118, %119 : vector<8x128xf32>
    %121 = arith.minimumf %103, %115 : vector<8x128xf32>
    %122 = arith.maximumf %100, %112 : vector<8x128xf32>
    %123 = arith.subf %121, %122 : vector<8x128xf32>
    %cst_55 = arith.constant 0.000000e+00 : f32
    %124 = vector.broadcast %cst_55 : f32 to vector<8x128xf32>
    %125 = arith.maximumf %123, %124 : vector<8x128xf32>
    %126 = arith.mulf %120, %125 : vector<8x128xf32>
    %127 = arith.subf %97, %94 : vector<8x128xf32>
    %128 = arith.subf %103, %100 : vector<8x128xf32>
    %129 = arith.mulf %127, %128 : vector<8x128xf32>
    %130 = math.absf %129 : vector<8x128xf32>
    %131 = arith.subf %109, %106 : vector<8x128xf32>
    %132 = arith.subf %115, %112 : vector<8x128xf32>
    %133 = arith.mulf %131, %132 : vector<8x128xf32>
    %134 = math.absf %133 : vector<8x128xf32>
    %135 = arith.addf %130, %134 : vector<8x128xf32>
    %136 = arith.subf %135, %126 : vector<8x128xf32>
    %cst_56 = arith.constant 9.99999997E-7 : f32
    %137 = vector.broadcast %cst_56 : f32 to vector<8x128xf32>
    %138 = arith.addf %136, %137 : vector<8x128xf32>
    %139 = tpu.reciprocal %138 {approx = true} : vector<8x128xf32> -> vector<8x128xf32>
    %140 = arith.mulf %126, %139 : vector<8x128xf32>
    %141 = arith.mulf %140, %36 : vector<8x128xf32>
    %142 = arith.subf %61, %141 : vector<8x128xf32>
    %143 = arith.mulf %142, %142 : vector<8x128xf32>
    %cst_57 = arith.constant 0.000000e+00 : f32
    %144 = vector.broadcast %cst_57 : f32 to vector<8x128xf32>
    %145 = arith.select %39, %143, %144 : vector<8x128xi1>, vector<8x128xf32>
    %146 = arith.divf %89, %31 : vector<8x128xf32>
    %cst_58 = arith.constant 1.000000e-16 : f32
    %147 = vector.broadcast %cst_58 : f32 to vector<8x128xf32>
    %148 = arith.addf %147, %146 : vector<8x128xf32>
    %149 = math.log %148 : vector<8x128xf32>
    %150 = arith.divf %91, %34 : vector<8x128xf32>
    %cst_59 = arith.constant 1.000000e-16 : f32
    %151 = vector.broadcast %cst_59 : f32 to vector<8x128xf32>
    %152 = arith.addf %151, %150 : vector<8x128xf32>
    %153 = math.log %152 : vector<8x128xf32>
    %154 = arith.subf %68, %85 : vector<8x128xf32>
    %155 = arith.mulf %154, %154 : vector<8x128xf32>
    %156 = arith.subf %75, %87 : vector<8x128xf32>
    %157 = arith.mulf %156, %156 : vector<8x128xf32>
    %158 = arith.addf %155, %157 : vector<8x128xf32>
    %159 = arith.subf %77, %149 : vector<8x128xf32>
    %160 = arith.mulf %159, %159 : vector<8x128xf32>
    %161 = arith.addf %158, %160 : vector<8x128xf32>
    %162 = arith.subf %79, %153 : vector<8x128xf32>
    %163 = arith.mulf %162, %162 : vector<8x128xf32>
    %164 = arith.addf %161, %163 : vector<8x128xf32>
    %cst_60 = arith.constant 0.000000e+00 : f32
    %165 = vector.broadcast %cst_60 : f32 to vector<8x128xf32>
    %166 = arith.select %39, %164, %165 : vector<8x128xi1>, vector<8x128xf32>
    %c5 = arith.constant 5 : index
    %c0_61 = arith.constant 0 : index
    %c0_62 = arith.constant 0 : index
    %167 = vector.load %arg4[%c5, %c0_61, %c0_62] : memref<6x8x128xf32, #tpu.memory_space<vmem>>, vector<1x8x128xf32>
    %168 = vector.shape_cast %167 : vector<1x8x128xf32> to vector<8x128xf32>
    %169 = arith.fptosi %168 : vector<8x128xf32> to vector<8x128xi32>
    %c5_63 = arith.constant 5 : index
    %c0_64 = arith.constant 0 : index
    %c0_65 = arith.constant 0 : index
    %170 = vector.load %arg3[%c5_63, %c0_64, %c0_65] : memref<9x8x128xf32, #tpu.memory_space<vmem>>, vector<1x8x128xf32>
    %171 = vector.shape_cast %170 : vector<1x8x128xf32> to vector<8x128xf32>
    %c6 = arith.constant 6 : index
    %c0_66 = arith.constant 0 : index
    %c0_67 = arith.constant 0 : index
    %172 = vector.load %arg3[%c6, %c0_66, %c0_67] : memref<9x8x128xf32, #tpu.memory_space<vmem>>, vector<1x8x128xf32>
    %173 = vector.shape_cast %172 : vector<1x8x128xf32> to vector<8x128xf32>
    %174 = arith.maximumf %171, %173 : vector<8x128xf32>
    %c7 = arith.constant 7 : index
    %c0_68 = arith.constant 0 : index
    %c0_69 = arith.constant 0 : index
    %175 = vector.load %arg3[%c7, %c0_68, %c0_69] : memref<9x8x128xf32, #tpu.memory_space<vmem>>, vector<1x8x128xf32>
    %176 = vector.shape_cast %175 : vector<1x8x128xf32> to vector<8x128xf32>
    %177 = arith.maximumf %174, %176 : vector<8x128xf32>
    %c8 = arith.constant 8 : index
    %c0_70 = arith.constant 0 : index
    %c0_71 = arith.constant 0 : index
    %178 = vector.load %arg3[%c8, %c0_70, %c0_71] : memref<9x8x128xf32, #tpu.memory_space<vmem>>, vector<1x8x128xf32>
    %179 = vector.shape_cast %178 : vector<1x8x128xf32> to vector<8x128xf32>
    %180 = arith.maximumf %177, %179 : vector<8x128xf32>
    %cst_72 = arith.constant 0.000000e+00 : f32
    %181 = vector.broadcast %cst_72 : f32 to vector<8x128xf32>
    %cst_73 = arith.constant 0.000000e+00 : f32
    %182 = vector.broadcast %cst_73 : f32 to vector<8x128xf32>
    %c5_74 = arith.constant 5 : index
    %c0_75 = arith.constant 0 : index
    %c0_76 = arith.constant 0 : index
    %183 = vector.load %arg3[%c5_74, %c0_75, %c0_76] : memref<9x8x128xf32, #tpu.memory_space<vmem>>, vector<1x8x128xf32>
    %184 = vector.shape_cast %183 : vector<1x8x128xf32> to vector<8x128xf32>
    %185 = arith.subf %184, %180 : vector<8x128xf32>
    %186 = math.exp %185 : vector<8x128xf32>
    %187 = arith.addf %181, %186 : vector<8x128xf32>
    %c0_i32_77 = arith.constant 0 : i32
    %188 = vector.broadcast %c0_i32_77 : i32 to vector<8x128xi32>
    %189 = arith.cmpi eq, %169, %188 : vector<8x128xi32>
    %cst_78 = arith.constant 0.000000e+00 : f32
    %190 = vector.broadcast %cst_78 : f32 to vector<8x128xf32>
    %191 = arith.select %189, %184, %190 : vector<8x128xi1>, vector<8x128xf32>
    %192 = arith.addf %182, %191 : vector<8x128xf32>
    %c6_79 = arith.constant 6 : index
    %c0_80 = arith.constant 0 : index
    %c0_81 = arith.constant 0 : index
    %193 = vector.load %arg3[%c6_79, %c0_80, %c0_81] : memref<9x8x128xf32, #tpu.memory_space<vmem>>, vector<1x8x128xf32>
    %194 = vector.shape_cast %193 : vector<1x8x128xf32> to vector<8x128xf32>
    %195 = arith.subf %194, %180 : vector<8x128xf32>
    %196 = math.exp %195 : vector<8x128xf32>
    %197 = arith.addf %187, %196 : vector<8x128xf32>
    %c1_i32 = arith.constant 1 : i32
    %198 = vector.broadcast %c1_i32 : i32 to vector<8x128xi32>
    %199 = arith.cmpi eq, %169, %198 : vector<8x128xi32>
    %cst_82 = arith.constant 0.000000e+00 : f32
    %200 = vector.broadcast %cst_82 : f32 to vector<8x128xf32>
    %201 = arith.select %199, %194, %200 : vector<8x128xi1>, vector<8x128xf32>
    %202 = arith.addf %192, %201 : vector<8x128xf32>
    %c7_83 = arith.constant 7 : index
    %c0_84 = arith.constant 0 : index
    %c0_85 = arith.constant 0 : index
    %203 = vector.load %arg3[%c7_83, %c0_84, %c0_85] : memref<9x8x128xf32, #tpu.memory_space<vmem>>, vector<1x8x128xf32>
    %204 = vector.shape_cast %203 : vector<1x8x128xf32> to vector<8x128xf32>
    %205 = arith.subf %204, %180 : vector<8x128xf32>
    %206 = math.exp %205 : vector<8x128xf32>
    %207 = arith.addf %197, %206 : vector<8x128xf32>
    %c2_i32_86 = arith.constant 2 : i32
    %208 = vector.broadcast %c2_i32_86 : i32 to vector<8x128xi32>
    %209 = arith.cmpi eq, %169, %208 : vector<8x128xi32>
    %cst_87 = arith.constant 0.000000e+00 : f32
    %210 = vector.broadcast %cst_87 : f32 to vector<8x128xf32>
    %211 = arith.select %209, %204, %210 : vector<8x128xi1>, vector<8x128xf32>
    %212 = arith.addf %202, %211 : vector<8x128xf32>
    %c8_88 = arith.constant 8 : index
    %c0_89 = arith.constant 0 : index
    %c0_90 = arith.constant 0 : index
    %213 = vector.load %arg3[%c8_88, %c0_89, %c0_90] : memref<9x8x128xf32, #tpu.memory_space<vmem>>, vector<1x8x128xf32>
    %214 = vector.shape_cast %213 : vector<1x8x128xf32> to vector<8x128xf32>
    %215 = arith.subf %214, %180 : vector<8x128xf32>
    %216 = math.exp %215 : vector<8x128xf32>
    %217 = arith.addf %207, %216 : vector<8x128xf32>
    %c3_i32 = arith.constant 3 : i32
    %218 = vector.broadcast %c3_i32 : i32 to vector<8x128xi32>
    %219 = arith.cmpi eq, %169, %218 : vector<8x128xi32>
    %cst_91 = arith.constant 0.000000e+00 : f32
    %220 = vector.broadcast %cst_91 : f32 to vector<8x128xf32>
    %221 = arith.select %219, %214, %220 : vector<8x128xi1>, vector<8x128xf32>
    %222 = arith.addf %212, %221 : vector<8x128xf32>
    %223 = math.log %217 : vector<8x128xf32>
    %224 = arith.addf %180, %223 : vector<8x128xf32>
    %225 = arith.subf %224, %222 : vector<8x128xf32>
    %cst_92 = arith.constant 0.000000e+00 : f32
    %226 = vector.broadcast %cst_92 : f32 to vector<8x128xf32>
    %227 = arith.select %39, %225, %226 : vector<8x128xi1>, vector<8x128xf32>
    %c0_93 = arith.constant 0 : index
    %c0_94 = arith.constant 0 : index
    %c0_95 = arith.constant 0 : index
    %228 = vector.load %arg6[%c0_93, %c0_94, %c0_95] : memref<8x8x128xf32, #tpu.memory_space<vmem>>, vector<1x8x128xf32>
    %229 = vector.shape_cast %228 : vector<1x8x128xf32> to vector<8x128xf32>
    %230 = arith.addf %229, %54 : vector<8x128xf32>
    %c0_96 = arith.constant 0 : index
    %c0_97 = arith.constant 0 : index
    %c0_98 = arith.constant 0 : index
    %231 = vector.load %arg6[%c0_96, %c0_97, %c0_98] : memref<8x8x128xf32, #tpu.memory_space<vmem>>, vector<1x8x128xf32>
    %232 = vector.shape_cast %231 : vector<1x8x128xf32> to vector<8x128xf32>
    %233 = vector.shape_cast %230 : vector<8x128xf32> to vector<1x8x128xf32>
    tpu.vector_store %arg6[%c0_96, %c0_97, %c0_98], %233 {strides = array<i32>} : memref<8x8x128xf32, #tpu.memory_space<vmem>>, vector<1x8x128xf32>,
    %c1_99 = arith.constant 1 : index
    %c0_100 = arith.constant 0 : index
    %c0_101 = arith.constant 0 : index
    %234 = vector.load %arg6[%c1_99, %c0_100, %c0_101] : memref<8x8x128xf32, #tpu.memory_space<vmem>>, vector<1x8x128xf32>
    %235 = vector.shape_cast %234 : vector<1x8x128xf32> to vector<8x128xf32>
    %236 = arith.extui %42 : vector<8x128xi1> to vector<8x128xi32>
    %237 = arith.sitofp %236 : vector<8x128xi32> to vector<8x128xf32>
    %238 = arith.addf %235, %237 : vector<8x128xf32>
    %c1_102 = arith.constant 1 : index
    %c0_103 = arith.constant 0 : index
    %c0_104 = arith.constant 0 : index
    %239 = vector.load %arg6[%c1_102, %c0_103, %c0_104] : memref<8x8x128xf32, #tpu.memory_space<vmem>>, vector<1x8x128xf32>
    %240 = vector.shape_cast %239 : vector<1x8x128xf32> to vector<8x128xf32>
    %241 = vector.shape_cast %238 : vector<8x128xf32> to vector<1x8x128xf32>
    tpu.vector_store %arg6[%c1_102, %c0_103, %c0_104], %241 {strides = array<i32>} : memref<8x8x128xf32, #tpu.memory_space<vmem>>, vector<1x8x128xf32>,
    %c2_105 = arith.constant 2 : index
    %c0_106 = arith.constant 0 : index
    %c0_107 = arith.constant 0 : index
    %242 = vector.load %arg6[%c2_105, %c0_106, %c0_107] : memref<8x8x128xf32, #tpu.memory_space<vmem>>, vector<1x8x128xf32>
    %243 = vector.shape_cast %242 : vector<1x8x128xf32> to vector<8x128xf32>
    %244 = arith.extui %39 : vector<8x128xi1> to vector<8x128xi32>
    %245 = arith.sitofp %244 : vector<8x128xi32> to vector<8x128xf32>
    %246 = arith.addf %243, %245 : vector<8x128xf32>
    %c2_108 = arith.constant 2 : index
    %c0_109 = arith.constant 0 : index
    %c0_110 = arith.constant 0 : index
    %247 = vector.load %arg6[%c2_108, %c0_109, %c0_110] : memref<8x8x128xf32, #tpu.memory_space<vmem>>, vector<1x8x128xf32>
    %248 = vector.shape_cast %247 : vector<1x8x128xf32> to vector<8x128xf32>
    %249 = vector.shape_cast %246 : vector<8x128xf32> to vector<1x8x128xf32>
    tpu.vector_store %arg6[%c2_108, %c0_109, %c0_110], %249 {strides = array<i32>} : memref<8x8x128xf32, #tpu.memory_space<vmem>>, vector<1x8x128xf32>,
    %c3_111 = arith.constant 3 : index
    %c0_112 = arith.constant 0 : index
    %c0_113 = arith.constant 0 : index
    %250 = vector.load %arg6[%c3_111, %c0_112, %c0_113] : memref<8x8x128xf32, #tpu.memory_space<vmem>>, vector<1x8x128xf32>
    %251 = vector.shape_cast %250 : vector<1x8x128xf32> to vector<8x128xf32>
    %252 = arith.addf %251, %145 : vector<8x128xf32>
    %c3_114 = arith.constant 3 : index
    %c0_115 = arith.constant 0 : index
    %c0_116 = arith.constant 0 : index
    %253 = vector.load %arg6[%c3_114, %c0_115, %c0_116] : memref<8x8x128xf32, #tpu.memory_space<vmem>>, vector<1x8x128xf32>
    %254 = vector.shape_cast %253 : vector<1x8x128xf32> to vector<8x128xf32>
    %255 = vector.shape_cast %252 : vector<8x128xf32> to vector<1x8x128xf32>
    tpu.vector_store %arg6[%c3_114, %c0_115, %c0_116], %255 {strides = array<i32>} : memref<8x8x128xf32, #tpu.memory_space<vmem>>, vector<1x8x128xf32>,
    %c4_117 = arith.constant 4 : index
    %c0_118 = arith.constant 0 : index
    %c0_119 = arith.constant 0 : index
    %256 = vector.load %arg6[%c4_117, %c0_118, %c0_119] : memref<8x8x128xf32, #tpu.memory_space<vmem>>, vector<1x8x128xf32>
    %257 = vector.shape_cast %256 : vector<1x8x128xf32> to vector<8x128xf32>
    %258 = arith.addf %257, %166 : vector<8x128xf32>
    %c4_120 = arith.constant 4 : index
    %c0_121 = arith.constant 0 : index
    %c0_122 = arith.constant 0 : index
    %259 = vector.load %arg6[%c4_120, %c0_121, %c0_122] : memref<8x8x128xf32, #tpu.memory_space<vmem>>, vector<1x8x128xf32>
    %260 = vector.shape_cast %259 : vector<1x8x128xf32> to vector<8x128xf32>
    %261 = vector.shape_cast %258 : vector<8x128xf32> to vector<1x8x128xf32>
    tpu.vector_store %arg6[%c4_120, %c0_121, %c0_122], %261 {strides = array<i32>} : memref<8x8x128xf32, #tpu.memory_space<vmem>>, vector<1x8x128xf32>,
    %c5_123 = arith.constant 5 : index
    %c0_124 = arith.constant 0 : index
    %c0_125 = arith.constant 0 : index
    %262 = vector.load %arg6[%c5_123, %c0_124, %c0_125] : memref<8x8x128xf32, #tpu.memory_space<vmem>>, vector<1x8x128xf32>
    %263 = vector.shape_cast %262 : vector<1x8x128xf32> to vector<8x128xf32>
    %264 = arith.addf %263, %227 : vector<8x128xf32>
    %c5_126 = arith.constant 5 : index
    %c0_127 = arith.constant 0 : index
    %c0_128 = arith.constant 0 : index
    %265 = vector.load %arg6[%c5_126, %c0_127, %c0_128] : memref<8x8x128xf32, #tpu.memory_space<vmem>>, vector<1x8x128xf32>
    %266 = vector.shape_cast %265 : vector<1x8x128xf32> to vector<8x128xf32>
    %267 = vector.shape_cast %264 : vector<8x128xf32> to vector<1x8x128xf32>
    tpu.vector_store %arg6[%c5_126, %c0_127, %c0_128], %267 {strides = array<i32>} : memref<8x8x128xf32, #tpu.memory_space<vmem>>, vector<1x8x128xf32>,
    %c1_i32_129 = arith.constant 1 : i32
    %268 = arith.cmpi eq, %arg1, %c1_i32_129 : i32
    %269 = arith.extui %268 : i1 to i32
    %c0_i32_130 = arith.constant 0 : i32
    %270 = arith.cmpi ne, %269, %c0_i32_130 : i32
    scf.if %270 {
      %c0_131 = arith.constant 0 : index
      %c0_132 = arith.constant 0 : index
      %c0_133 = arith.constant 0 : index
      %271 = vector.load %arg6[%c0_131, %c0_132, %c0_133] : memref<8x8x128xf32, #tpu.memory_space<vmem>>, vector<1x8x128xf32>
      %272 = vector.shape_cast %271 : vector<1x8x128xf32> to vector<8x128xf32>
      %cst_134 = arith.constant dense<0.000000e+00> : vector<128xf32>
      %273 = vector.multi_reduction <add>, %272, %cst_134 [0] : vector<8x128xf32> to vector<128xf32>
      %274 = vector.shape_cast %273 : vector<128xf32> to vector<1x128xf32>
      %c1_135 = arith.constant 1 : index
      %c0_136 = arith.constant 0 : index
      %c0_137 = arith.constant 0 : index
      %275 = vector.load %arg6[%c1_135, %c0_136, %c0_137] : memref<8x8x128xf32, #tpu.memory_space<vmem>>, vector<1x8x128xf32>
      %276 = vector.shape_cast %275 : vector<1x8x128xf32> to vector<8x128xf32>
      %cst_138 = arith.constant dense<0.000000e+00> : vector<128xf32>
      %277 = vector.multi_reduction <add>, %276, %cst_138 [0] : vector<8x128xf32> to vector<128xf32>
      %278 = vector.shape_cast %277 : vector<128xf32> to vector<1x128xf32>
      %c2_139 = arith.constant 2 : index
      %c0_140 = arith.constant 0 : index
      %c0_141 = arith.constant 0 : index
      %279 = vector.load %arg6[%c2_139, %c0_140, %c0_141] : memref<8x8x128xf32, #tpu.memory_space<vmem>>, vector<1x8x128xf32>
      %280 = vector.shape_cast %279 : vector<1x8x128xf32> to vector<8x128xf32>
      %cst_142 = arith.constant dense<0.000000e+00> : vector<128xf32>
      %281 = vector.multi_reduction <add>, %280, %cst_142 [0] : vector<8x128xf32> to vector<128xf32>
      %282 = vector.shape_cast %281 : vector<128xf32> to vector<1x128xf32>
      %c3_143 = arith.constant 3 : index
      %c0_144 = arith.constant 0 : index
      %c0_145 = arith.constant 0 : index
      %283 = vector.load %arg6[%c3_143, %c0_144, %c0_145] : memref<8x8x128xf32, #tpu.memory_space<vmem>>, vector<1x8x128xf32>
      %284 = vector.shape_cast %283 : vector<1x8x128xf32> to vector<8x128xf32>
      %cst_146 = arith.constant dense<0.000000e+00> : vector<128xf32>
      %285 = vector.multi_reduction <add>, %284, %cst_146 [0] : vector<8x128xf32> to vector<128xf32>
      %286 = vector.shape_cast %285 : vector<128xf32> to vector<1x128xf32>
      %c4_147 = arith.constant 4 : index
      %c0_148 = arith.constant 0 : index
      %c0_149 = arith.constant 0 : index
      %287 = vector.load %arg6[%c4_147, %c0_148, %c0_149] : memref<8x8x128xf32, #tpu.memory_space<vmem>>, vector<1x8x128xf32>
      %288 = vector.shape_cast %287 : vector<1x8x128xf32> to vector<8x128xf32>
      %cst_150 = arith.constant dense<0.000000e+00> : vector<128xf32>
      %289 = vector.multi_reduction <add>, %288, %cst_150 [0] : vector<8x128xf32> to vector<128xf32>
      %290 = vector.shape_cast %289 : vector<128xf32> to vector<1x128xf32>
      %c5_151 = arith.constant 5 : index
      %c0_152 = arith.constant 0 : index
      %c0_153 = arith.constant 0 : index
      %291 = vector.load %arg6[%c5_151, %c0_152, %c0_153] : memref<8x8x128xf32, #tpu.memory_space<vmem>>, vector<1x8x128xf32>
      %292 = vector.shape_cast %291 : vector<1x8x128xf32> to vector<8x128xf32>
      %cst_154 = arith.constant dense<0.000000e+00> : vector<128xf32>
      %293 = vector.multi_reduction <add>, %292, %cst_154 [0] : vector<8x128xf32> to vector<128xf32>
      %294 = vector.shape_cast %293 : vector<128xf32> to vector<1x128xf32>
      %c6_155 = arith.constant 6 : index
      %c0_156 = arith.constant 0 : index
      %c0_157 = arith.constant 0 : index
      %295 = vector.load %arg6[%c6_155, %c0_156, %c0_157] : memref<8x8x128xf32, #tpu.memory_space<vmem>>, vector<1x8x128xf32>
      %296 = vector.shape_cast %295 : vector<1x8x128xf32> to vector<8x128xf32>
      %cst_158 = arith.constant dense<0.000000e+00> : vector<128xf32>
      %297 = vector.multi_reduction <add>, %296, %cst_158 [0] : vector<8x128xf32> to vector<128xf32>
      %298 = vector.shape_cast %297 : vector<128xf32> to vector<1x128xf32>
      %c7_159 = arith.constant 7 : index
      %c0_160 = arith.constant 0 : index
      %c0_161 = arith.constant 0 : index
      %299 = vector.load %arg6[%c7_159, %c0_160, %c0_161] : memref<8x8x128xf32, #tpu.memory_space<vmem>>, vector<1x8x128xf32>
      %300 = vector.shape_cast %299 : vector<1x8x128xf32> to vector<8x128xf32>
      %cst_162 = arith.constant dense<0.000000e+00> : vector<128xf32>
      %301 = vector.multi_reduction <add>, %300, %cst_162 [0] : vector<8x128xf32> to vector<128xf32>
      %302 = vector.shape_cast %301 : vector<128xf32> to vector<1x128xf32>
      %303 = tpu.concatenate %274, %278, %282, %286, %290, %294, %298, %302 in 0 : vector<1x128xf32>, vector<1x128xf32>, vector<1x128xf32>, vector<1x128xf32>, vector<1x128xf32>, vector<1x128xf32>, vector<1x128xf32>, vector<1x128xf32> -> vector<8x128xf32>
      %c0_163 = arith.constant 0 : index
      %c0_164 = arith.constant 0 : index
      %304 = vector.load %arg5[%c0_163, %c0_164] : memref<8x128xf32, #tpu.memory_space<vmem>>, vector<8x128xf32>
      tpu.vector_store %arg5[%c0_163, %c0_164], %303 {strides = array<i32>} : memref<8x128xf32, #tpu.memory_space<vmem>>, vector<8x128xf32>,
    } else {
    }
    return
  }
  func.func @transform_0(%arg0: i32, %arg1: i32) -> (i32, i32) {
    %c0_i32 = arith.constant 0 : i32
    %c0_i32_0 = arith.constant 0 : i32
    %c0_i32_1 = arith.constant 0 : i32
    return %c0_i32, %c0_i32_0 : i32, i32
  }
  func.func @transform_1(%arg0: i32, %arg1: i32) -> (i32, i32, i32) {
    %c2_i32 = arith.constant 2 : i32
    %0 = arith.muli %arg0, %c2_i32 : i32
    %1 = arith.addi %0, %arg1 : i32
    %c0_i32 = arith.constant 0 : i32
    %c0_i32_0 = arith.constant 0 : i32
    %c0_i32_1 = arith.constant 0 : i32
    return %c0_i32, %1, %c0_i32_0 : i32, i32, i32
  }
  func.func @transform_2(%arg0: i32, %arg1: i32) -> (i32, i32, i32) {
    %c2_i32 = arith.constant 2 : i32
    %0 = arith.muli %arg0, %c2_i32 : i32
    %1 = arith.addi %0, %arg1 : i32
    %c0_i32 = arith.constant 0 : i32
    %c0_i32_0 = arith.constant 0 : i32
    %c0_i32_1 = arith.constant 0 : i32
    return %c0_i32, %1, %c0_i32_0 : i32, i32, i32
  }
  func.func @transform_3(%arg0: i32, %arg1: i32) -> (i32, i32) {
    %c0_i32 = arith.constant 0 : i32
    %c0_i32_0 = arith.constant 0 : i32
    return %arg0, %c0_i32 : i32, i32
  }
}

</mosaic_0001>

<llo_original>
// kernel: yolo_loss.1
$region0: #{yolo_loss.1}
  #allocation0 [shape = 'u32[]', space=smem, size = 0x4, offset = 0x4, fixed_abs, tag = 'smem constant byte address 0x4 - core index']
  #allocation1 [shape = 'u32[144,128]{1,0:T(1,128)}', space=vmem, size = 0x12000, scoped, tag = 'internal scratch']
  #allocation2 [shape = 'f32[8,8,128]{2,1,0:T(8,128)}', space=vmem, size = 0x8000, scoped, tag = 'scratch operand']
  %s0 = inlined_call_operand.vmem [shape: f32[3,2], index: 0, kind: input, shape index: {}]
  %s1 = inlined_call_operand.vmem [shape: f32[9,32,128], index: 1, kind: input, shape index: {}]
  %s2 = inlined_call_operand.vmem [shape: f32[6,32,128], index: 2, kind: input, shape index: {}]
  %s3 = inlined_call_operand.vmem [shape: f32[16,128], index: 3, kind: output, shape index: {}]
  %s4 = sld [smem:[#allocation0]]
  $region133: #{yolo_loss.1} parent=0
    _
  %s6 = ssub.s32 1, %s4
  %s7 = scalar_select 0, %s6, %s4
  $region1: #{yolo_loss.1} parent=0
    #allocation3 [shape = 'u8[2048]{0}', space=smem, size = 0x800, scoped, tag = 'input window, operand 0, single buffered']
    #allocation4 [shape = 's32[2]{0}', space=sflag, size = 0x8, scoped, tag = 'scoped memory for yolo_loss.1']
    #allocation5 [shape = 'u8[73728]{0}', space=vmem, size = 0x12000, scoped, tag = 'input window, operand 1']
    #allocation6 [shape = 'u8[49152]{0}', space=vmem, size = 0xc000, scoped, tag = 'input window, operand 2']
    %8 = vsyncpa [#allocation4], 0
    loop: start=0, step=1, limit=6
    $region2: #{yolo_loss.1} parent=1 // loop_pre_header
      _
    $region3: #{yolo_loss.1} parent=1 // loop_header
      %s10 = sphi 0, %s14
      %p11 = scmp.ge.s32.totalorder %s10, 6
      %s17 = sphi 0, %s29
      %s18 = sphi 0, %s25
      %s19 = sphi 0, %s17
      %s20 = sphi 0, %s18
      %s21 = sphi 0, %s19
      %s22 = sphi 0, %s20
      %s30 = sphi 0, %s30
      %s32 = sphi 0, %s30
      %s33 = sphi 0, %s32
      %s47 = sphi 0, %s33
      %s57 = sphi 0, %s59
      %s60 = sphi 0, %s57
      %s61 = sphi 0, %s60
      %s77 = sphi 0, %s61
      %s87 = sphi 0, %s89
      %s90 = sphi 0, %s87
      %s91 = sphi 0, %s90
      %s107 = sphi 0, %s91
      %s113 = sphi 0, %s115
      %s116 = sphi 0, %s113
      %s117 = sphi 0, %s116
      %s133 = sphi 0, %s117
    $region4: #{yolo_loss.1} parent=1 // loop_header_branch
      %13 = sbr.rel (%p11) target = $region8
    $region5: #{yolo_loss.1} parent=1 // loop_body
      %s15 = ssub.s32 %s10, 1
      %s16 = ssub.s32 %s10, 2
      %s23 = sadd.s32 1, %s18
      %p24 = scmp.ge.s32.totalorder %s23, 2
      %s25 = scalar_select %p24, 0, %s23
      %s26 = sadd.s32 1, %s17
      %s27 = scalar_select %p24, %s26, %s17
      %p28 = scmp.ge.s32.totalorder %s27, 2
      %s29 = scalar_select %p28, 0, %s27
      %s31 = sadd.s32 %s30, 1
      %p34 = scmp.eq.s32.totalorder %s10, 3
      %p35 = scmp.ne.s32.totalorder %s30, %s32
      %p36 = scmp.eq.s32.totalorder %s10, 0
      %p37 = por %p35, %p36
      %p38 = scmp.ne.s32.totalorder %s30, %s32
      %p39 = scmp.eq.s32.totalorder %s15, 3
      %p40 = por %p38, %p39
      %p41 = scmp.ne.s32.totalorder %s32, %s33
      %p42 = scmp.eq.s32.totalorder %s15, 0
      %p43 = por %p41, %p42
      %p44 = scmp.ne.s32.totalorder %s32, %s33
      %p45 = scmp.eq.s32.totalorder %s16, 3
      %p46 = por %p44, %p45
      %p48 = scmp.ne.s32.totalorder %s33, %s47
      %p49 = scmp.eq.s32.totalorder %s16, 0
      %p50 = por %p48, %p49
      %s51 = smul.u32 %s17, 2
      %s52 = sadd.s32 %s51, %s18
      %s53 = smul.u32 %s29, 2
      %s54 = sadd.s32 %s53, %s25
      %s55 = ssub.s32 %s52, %s54
      %p56 = scmp.eq.s32.totalorder %s55, 0
      %s58 = sadd.s32 %s57, 1
      %s59 = scalar_select %p56, %s57, %s58
      %p62 = pneg %p56
      %p63 = scmp.eq.s32.totalorder %s10, 3
      %p64 = por %p62, %p63
      %p65 = scmp.ne.s32.totalorder %s57, %s60
      %p66 = scmp.eq.s32.totalorder %s10, 0
      %p67 = por %p65, %p66
      %p68 = scmp.ne.s32.totalorder %s57, %s60
      %p69 = scmp.eq.s32.totalorder %s15, 3
      %p70 = por %p68, %p69
      %p71 = scmp.ne.s32.totalorder %s60, %s61
      %p72 = scmp.eq.s32.totalorder %s15, 0
      %p73 = por %p71, %p72
      %p74 = scmp.ne.s32.totalorder %s60, %s61
      %p75 = scmp.eq.s32.totalorder %s16, 3
      %p76 = por %p74, %p75
      %p78 = scmp.ne.s32.totalorder %s61, %s77
      %p79 = scmp.eq.s32.totalorder %s16, 0
      %p80 = por %p78, %p79
      %s81 = smul.u32 %s17, 2
      %s82 = sadd.s32 %s81, %s18
      %s83 = smul.u32 %s29, 2
      %s84 = sadd.s32 %s83, %s25
      %s85 = ssub.s32 %s82, %s84
      %p86 = scmp.eq.s32.totalorder %s85, 0
      %s88 = sadd.s32 %s87, 1
      %s89 = scalar_select %p86, %s87, %s88
      %p92 = pneg %p86
      %p93 = scmp.eq.s32.totalorder %s10, 3
      %p94 = por %p92, %p93
      %p95 = scmp.ne.s32.totalorder %s87, %s90
      %p96 = scmp.eq.s32.totalorder %s10, 0
      %p97 = por %p95, %p96
      %p98 = scmp.ne.s32.totalorder %s87, %s90
      %p99 = scmp.eq.s32.totalorder %s15, 3
      %p100 = por %p98, %p99
      %p101 = scmp.ne.s32.totalorder %s90, %s91
      %p102 = scmp.eq.s32.totalorder %s15, 0
      %p103 = por %p101, %p102
      %p104 = scmp.ne.s32.totalorder %s90, %s91
      %p105 = scmp.eq.s32.totalorder %s16, 3
      %p106 = por %p104, %p105
      %p108 = scmp.ne.s32.totalorder %s91, %s107
      %p109 = scmp.eq.s32.totalorder %s16, 0
      %p110 = por %p108, %p109
      %s111 = ssub.s32 %s17, %s29
      %p112 = scmp.eq.s32.totalorder %s111, 0
      %s114 = sadd.s32 %s113, 1
      %s115 = scalar_select %p112, %s113, %s114
      %p118 = pneg %p112
      %p119 = scmp.eq.s32.totalorder %s10, 3
      %p120 = por %p118, %p119
      %p121 = scmp.ne.s32.totalorder %s113, %s116
      %p122 = scmp.eq.s32.totalorder %s10, 0
      %p123 = por %p121, %p122
      %p124 = scmp.ne.s32.totalorder %s113, %s116
      %p125 = scmp.eq.s32.totalorder %s15, 3
      %p126 = por %p124, %p125
      %p127 = scmp.ne.s32.totalorder %s116, %s117
      %p128 = scmp.eq.s32.totalorder %s15, 0
      %p129 = por %p127, %p128
      %p130 = scmp.ne.s32.totalorder %s116, %s117
      %p131 = scmp.eq.s32.totalorder %s16, 3
      %p132 = por %p130, %p131
      %p134 = scmp.ne.s32.totalorder %s117, %s133
      %p135 = scmp.eq.s32.totalorder %s16, 0
      %p136 = por %p134, %p135
      %p137 = scmp.le.s32.totalorder 1, %s10
      %p138 = scmp.lt.s32.totalorder %s10, 5
      %p139 = pnand %p137, %p138
      %p140 = pneg %p139
      // Predicated region
      $region9: #{yolo_loss.1} parent=5 // pred_check
        _
      $region10: #{yolo_loss.1} parent=5 // pred_check_branch
        %142 = sbr.rel (%p139) target = $region12
      $region11: #{yolo_loss.1} parent=5 // pred_region
        %s143 = ssub.s32 %s10, 1
        // Predicated region
        $region13: #{yolo_loss.1} parent=11 // pred_check
          %p144 = pneg %p43
        $region14: #{yolo_loss.1} parent=11 // pred_check_branch
          %146 = sbr.rel (%p144) target = $region16
        $region15: #{yolo_loss.1} parent=11 // pred_region
          %s148 = ssub.s32 64, 64
          %149 = vsyncadd [#allocation4], %s148
          %s151 = sshll.u32 %s0, 4
          %s152 = int_to_ptr.vmem [resolvable:$true] %s151
          %154 = dma.vmem_to_smem %s152, 64, [#allocation3], [#allocation4]
        $region16: #{yolo_loss.1} parent=11 // pred_fallthru
          _
      $region12: #{yolo_loss.1} parent=5 // pred_fallthru
        _
      %p155 = scmp.lt.s32.totalorder %s10, 4
      // Predicated region
      $region17: #{yolo_loss.1} parent=5 // pred_check
        %p156 = pneg %p155
      $region18: #{yolo_loss.1} parent=5 // pred_check_branch
        %158 = sbr.rel (%p156) target = $region20
      $region19: #{yolo_loss.1} parent=5 // pred_region
        // Predicated region
        $region21: #{yolo_loss.1} parent=19 // pred_check
          %p159 = pneg %p67
        $region22: #{yolo_loss.1} parent=19 // pred_check_branch
          %161 = sbr.rel (%p159) target = $region24
        $region23: #{yolo_loss.1} parent=19 // pred_region
          %s162 = sand.u32 %s57, 1
          %s163 = sand.u32 %s57, 1
          %s164 = smul.addr %s163, 72
          %s165 = scalar_lea.vmem [#allocation5], %s164
          %s166 = smul.u32 %s17, 2
          %s167 = sadd.s32 %s166, %s18
          %s168 = smul.addr %s167, 8
          %s169 = scalar_lea.vmem %s1, %s168
          // Predicated region
          $region25: #{yolo_loss.1} parent=23 // pred_check
            _
          $region26: #{yolo_loss.1} parent=23 // pred_check_branch
            %171 = sbr.rel (0) target = $region28
          $region27: #{yolo_loss.1} parent=23 // pred_region
            // Predicated region
            $region29: #{yolo_loss.1} parent=27 // pred_check
              _
            $region30: #{yolo_loss.1} parent=27 // pred_check_branch
              %173 = sbr.rel (0) target = $region32
            $region31: #{yolo_loss.1} parent=27 // pred_region
              // Predicated region
              $region44: #{yolo_loss.1} parent=31 // pred_check
                _
              $region45: #{yolo_loss.1} parent=31 // pred_check_branch
                %204 = sbr.rel (0) target = $region47
              $region46: #{yolo_loss.1} parent=31 // pred_region
                loop: start=0, step=1, limit=1
                $region48: #{yolo_loss.1} parent=46 // loop_pre_header
                  _
                $region49: #{yolo_loss.1} parent=46 // loop_header
                  %s206 = sphi 0, %s210
                  %p207 = scmp.ge.s32.totalorder %s206, 1
                  %s211 = sphi %s169, %s169
                  %s212 = sphi %s165, %s165
                $region50: #{yolo_loss.1} parent=46 // loop_header_branch
                  %209 = sbr.rel (%p207) target = $region54
                $region51: #{yolo_loss.1} parent=46 // loop_body
                  %v213 = vld [vmem:[%s211] sm:$0xff]
                  %214 = vst [vmem:[%s212] sm:$0xff] %v213
                  %v215 = vld [vmem:[%s211 + $0x20] sm:$0xff]
                  %216 = vst [vmem:[%s212 + $0x8] sm:$0xff] %v215
                  %v217 = vld [vmem:[%s211 + $0x40] sm:$0xff]
                  %218 = vst [vmem:[%s212 + $0x10] sm:$0xff] %v217
                  %v219 = vld [vmem:[%s211 + $0x60] sm:$0xff]
                  %220 = vst [vmem:[%s212 + $0x18] sm:$0xff] %v219
                  %v221 = vld [vmem:[%s211 + $0x80] sm:$0xff]
                  %222 = vst [vmem:[%s212 + $0x20] sm:$0xff] %v221
                  %v223 = vld [vmem:[%s211 + $0xa0] sm:$0xff]
                  %224 = vst [vmem:[%s212 + $0x28] sm:$0xff] %v223
                  %v225 = vld [vmem:[%s211 + $0xc0] sm:$0xff]
                  %226 = vst [vmem:[%s212 + $0x30] sm:$0xff] %v225
                  %v227 = vld [vmem:[%s211 + $0xe0] sm:$0xff]
                  %228 = vst [vmem:[%s212 + $0x38] sm:$0xff] %v227
                  %v229 = vld [vmem:[%s211 + $0x100] sm:$0xff]
                  %230 = vst [vmem:[%s212 + $0x40] sm:$0xff] %v229
                $region52: #{yolo_loss.1} parent=46 // loop_footer
                  %s210 = sadd.s32 1, %s206
                $region53: #{yolo_loss.1} parent=46 // loop_footer_branch
                  %205 = sbr.rel target = $region49
                $region54: #{yolo_loss.1} parent=46 // loop_exit
                  _
              $region47: #{yolo_loss.1} parent=31 // pred_fallthru
                _
              // Predicated region
              $region55: #{yolo_loss.1} parent=31 // pred_check
                _
              $region56: #{yolo_loss.1} parent=31 // pred_check_branch
                %232 = sbr.rel target = $region58
              $region57: #{yolo_loss.1} parent=31 // pred_region
                _
              $region58: #{yolo_loss.1} parent=31 // pred_fallthru
                _
            $region32: #{yolo_loss.1} parent=27 // pred_fallthru
              _
            // Predicated region
            $region33: #{yolo_loss.1} parent=27 // pred_check
              _
            $region34: #{yolo_loss.1} parent=27 // pred_check_branch
              %175 = sbr.rel target = $region36
            $region35: #{yolo_loss.1} parent=27 // pred_region
              loop: start=0, step=1, limit=1
              $region37: #{yolo_loss.1} parent=35 // loop_pre_header
                _
              $region38: #{yolo_loss.1} parent=35 // loop_header
                %s178 = sphi 0, %s182
                %p179 = scmp.ge.s32.totalorder %s178, 1
                %s183 = sphi %s169, %s169
                %s184 = sphi %s165, %s165
              $region39: #{yolo_loss.1} parent=35 // loop_header_branch
                %181 = sbr.rel (%p179) target = $region43
              $region40: #{yolo_loss.1} parent=35 // loop_body
                %v185 = vld [vmem:[%s183] sm:$0xff]
                %186 = vst [vmem:[%s184] sm:$0xff] %v185
                %v187 = vld [vmem:[%s183 + $0x20] sm:$0xff]
                %188 = vst [vmem:[%s184 + $0x8] sm:$0xff] %v187
                %v189 = vld [vmem:[%s183 + $0x40] sm:$0xff]
                %190 = vst [vmem:[%s184 + $0x10] sm:$0xff] %v189
                %v191 = vld [vmem:[%s183 + $0x60] sm:$0xff]
                %192 = vst [vmem:[%s184 + $0x18] sm:$0xff] %v191
                %v193 = vld [vmem:[%s183 + $0x80] sm:$0xff]
                %194 = vst [vmem:[%s184 + $0x20] sm:$0xff] %v193
                %v195 = vld [vmem:[%s183 + $0xa0] sm:$0xff]
                %196 = vst [vmem:[%s184 + $0x28] sm:$0xff] %v195
                %v197 = vld [vmem:[%s183 + $0xc0] sm:$0xff]
                %198 = vst [vmem:[%s184 + $0x30] sm:$0xff] %v197
                %v199 = vld [vmem:[%s183 + $0xe0] sm:$0xff]
                %200 = vst [vmem:[%s184 + $0x38] sm:$0xff] %v199
                %v201 = vld [vmem:[%s183 + $0x100] sm:$0xff]
                %202 = vst [vmem:[%s184 + $0x40] sm:$0xff] %v201
              $region41: #{yolo_loss.1} parent=35 // loop_footer
                %s182 = sadd.s32 1, %s178
              $region42: #{yolo_loss.1} parent=35 // loop_footer_branch
                %177 = sbr.rel target = $region38
              $region43: #{yolo_loss.1} parent=35 // loop_exit
                _
            $region36: #{yolo_loss.1} parent=27 // pred_fallthru
              _
          $region28: #{yolo_loss.1} parent=23 // pred_fallthru
            _
          %233 = vnop
        $region24: #{yolo_loss.1} parent=19 // pred_fallthru
          _
        // Predicated region
        $region59: #{yolo_loss.1} parent=19 // pred_check
          %p234 = pneg %p97
        $region60: #{yolo_loss.1} parent=19 // pred_check_branch
          %236 = sbr.rel (%p234) target = $region62
        $region61: #{yolo_loss.1} parent=19 // pred_region
          %s237 = sand.u32 %s87, 1
          %s238 = sand.u32 %s87, 1
          %s239 = smul.addr %s238, 48
          %s240 = scalar_lea.vmem [#allocation6], %s239
          %s241 = smul.u32 %s17, 2
          %s242 = sadd.s32 %s241, %s18
          %s243 = smul.addr %s242, 8
          %s244 = scalar_lea.vmem %s2, %s243
          // Predicated region
          $region63: #{yolo_loss.1} parent=61 // pred_check
            _
          $region64: #{yolo_loss.1} parent=61 // pred_check_branch
            %246 = sbr.rel (0) target = $region66
          $region65: #{yolo_loss.1} parent=61 // pred_region
            // Predicated region
            $region67: #{yolo_loss.1} parent=65 // pred_check
              _
            $region68: #{yolo_loss.1} parent=65 // pred_check_branch
              %248 = sbr.rel (0) target = $region70
            $region69: #{yolo_loss.1} parent=65 // pred_region
              // Predicated region
              $region82: #{yolo_loss.1} parent=69 // pred_check
                _
              $region83: #{yolo_loss.1} parent=69 // pred_check_branch
                %273 = sbr.rel (0) target = $region85
              $region84: #{yolo_loss.1} parent=69 // pred_region
                loop: start=0, step=1, limit=1
                $region86: #{yolo_loss.1} parent=84 // loop_pre_header
                  _
                $region87: #{yolo_loss.1} parent=84 // loop_header
                  %s275 = sphi 0, %s279
                  %p276 = scmp.ge.s32.totalorder %s275, 1
                  %s280 = sphi %s244, %s244
                  %s281 = sphi %s240, %s240
                $region88: #{yolo_loss.1} parent=84 // loop_header_branch
                  %278 = sbr.rel (%p276) target = $region92
                $region89: #{yolo_loss.1} parent=84 // loop_body
                  %v282 = vld [vmem:[%s280] sm:$0xff]
                  %283 = vst [vmem:[%s281] sm:$0xff] %v282
                  %v284 = vld [vmem:[%s280 + $0x20] sm:$0xff]
                  %285 = vst [vmem:[%s281 + $0x8] sm:$0xff] %v284
                  %v286 = vld [vmem:[%s280 + $0x40] sm:$0xff]
                  %287 = vst [vmem:[%s281 + $0x10] sm:$0xff] %v286
                  %v288 = vld [vmem:[%s280 + $0x60] sm:$0xff]
                  %289 = vst [vmem:[%s281 + $0x18] sm:$0xff] %v288
                  %v290 = vld [vmem:[%s280 + $0x80] sm:$0xff]
                  %291 = vst [vmem:[%s281 + $0x20] sm:$0xff] %v290
                  %v292 = vld [vmem:[%s280 + $0xa0] sm:$0xff]
                  %293 = vst [vmem:[%s281 + $0x28] sm:$0xff] %v292
                $region90: #{yolo_loss.1} parent=84 // loop_footer
                  %s279 = sadd.s32 1, %s275
                $region91: #{yolo_loss.1} parent=84 // loop_footer_branch
                  %274 = sbr.rel target = $region87
                $region92: #{yolo_loss.1} parent=84 // loop_exit
                  _
              $region85: #{yolo_loss.1} parent=69 // pred_fallthru
                _
              // Predicated region
              $region93: #{yolo_loss.1} parent=69 // pred_check
                _
              $region94: #{yolo_loss.1} parent=69 // pred_check_branch
                %295 = sbr.rel target = $region96
              $region95: #{yolo_loss.1} parent=69 // pred_region
                _
              $region96: #{yolo_loss.1} parent=69 // pred_fallthru
                _
            $region70: #{yolo_loss.1} parent=65 // pred_fallthru
              _
            // Predicated region
            $region71: #{yolo_loss.1} parent=65 // pred_check
              _
            $region72: #{yolo_loss.1} parent=65 // pred_check_branch
              %250 = sbr.rel target = $region74
            $region73: #{yolo_loss.1} parent=65 // pred_region
              loop: start=0, step=1, limit=1
              $region75: #{yolo_loss.1} parent=73 // loop_pre_header
                _
              $region76: #{yolo_loss.1} parent=73 // loop_header
                %s253 = sphi 0, %s257
                %p254 = scmp.ge.s32.totalorder %s253, 1
                %s258 = sphi %s244, %s244
                %s259 = sphi %s240, %s240
              $region77: #{yolo_loss.1} parent=73 // loop_header_branch
                %256 = sbr.rel (%p254) target = $region81
              $region78: #{yolo_loss.1} parent=73 // loop_body
                %v260 = vld [vmem:[%s258] sm:$0xff]
                %261 = vst [vmem:[%s259] sm:$0xff] %v260
                %v262 = vld [vmem:[%s258 + $0x20] sm:$0xff]
                %263 = vst [vmem:[%s259 + $0x8] sm:$0xff] %v262
                %v264 = vld [vmem:[%s258 + $0x40] sm:$0xff]
                %265 = vst [vmem:[%s259 + $0x10] sm:$0xff] %v264
                %v266 = vld [vmem:[%s258 + $0x60] sm:$0xff]
                %267 = vst [vmem:[%s259 + $0x18] sm:$0xff] %v266
                %v268 = vld [vmem:[%s258 + $0x80] sm:$0xff]
                %269 = vst [vmem:[%s259 + $0x20] sm:$0xff] %v268
                %v270 = vld [vmem:[%s258 + $0xa0] sm:$0xff]
                %271 = vst [vmem:[%s259 + $0x28] sm:$0xff] %v270
              $region79: #{yolo_loss.1} parent=73 // loop_footer
                %s257 = sadd.s32 1, %s253
              $region80: #{yolo_loss.1} parent=73 // loop_footer_branch
                %252 = sbr.rel target = $region76
              $region81: #{yolo_loss.1} parent=73 // loop_exit
                _
            $region74: #{yolo_loss.1} parent=65 // pred_fallthru
              _
          $region66: #{yolo_loss.1} parent=61 // pred_fallthru
            _
          %296 = vnop
        $region62: #{yolo_loss.1} parent=19 // pred_fallthru
          _
      $region20: #{yolo_loss.1} parent=5 // pred_fallthru
        _
      %p297 = scmp.le.s32.totalorder 1, %s10
      %p298 = scmp.lt.s32.totalorder %s10, 5
      %p299 = pnand %p297, %p298
      %p300 = pneg %p299
      // Predicated region
      $region97: #{yolo_loss.1} parent=5 // pred_check
        _
      $region98: #{yolo_loss.1} parent=5 // pred_check_branch
        %302 = sbr.rel (%p299) target = $region100
      $region99: #{yolo_loss.1} parent=5 // pred_region
        %s303 = ssub.s32 %s10, 1
        // Predicated region
        $region101: #{yolo_loss.1} parent=99 // pred_check
          %p304 = pneg %p43
        $region102: #{yolo_loss.1} parent=99 // pred_check_branch
          %306 = sbr.rel (%p304) target = $region104
        $region103: #{yolo_loss.1} parent=99 // pred_region
          %307 = dma.done [#allocation4], 64
        $region104: #{yolo_loss.1} parent=99 // pred_fallthru
          _
        %s308 = sand.u32 %s60, 1
        %s309 = sand.u32 %s60, 1
        %s310 = smul.addr %s309, 72
        %s311 = scalar_lea.vmem [#allocation5], %s310
        // Predicated region
        $region105: #{yolo_loss.1} parent=99 // pred_check
          %p312 = pneg %p73
        $region106: #{yolo_loss.1} parent=99 // pred_check_branch
          %314 = sbr.rel (%p312) target = $region108
        $region107: #{yolo_loss.1} parent=99 // pred_region
          _
        $region108: #{yolo_loss.1} parent=99 // pred_fallthru
          _
        %s315 = sand.u32 %s90, 1
        %s316 = sand.u32 %s90, 1
        %s317 = smul.addr %s316, 48
        %s318 = scalar_lea.vmem [#allocation6], %s317
        // Predicated region
        $region109: #{yolo_loss.1} parent=99 // pred_check
          %p319 = pneg %p103
        $region110: #{yolo_loss.1} parent=99 // pred_check_branch
          %321 = sbr.rel (%p319) target = $region112
        $region111: #{yolo_loss.1} parent=99 // pred_region
          _
        $region112: #{yolo_loss.1} parent=99 // pred_fallthru
          _
        %322 = sfence
        %p323 = pneg %p43
        %p324 = pneg %p40
        %s325 = sand.u32 %s60, 1
        %s326 = sand.u32 %s60, 1
        %s327 = smul.addr %s326, 72
        %s328 = scalar_lea.vmem [#allocation5], %s327
        %p329 = pneg %p73
        %p330 = pneg %p70
        %s331 = sand.u32 %s90, 1
        %s332 = sand.u32 %s90, 1
        %s333 = smul.addr %s332, 48
        %s334 = scalar_lea.vmem [#allocation6], %s333
        %p335 = pneg %p103
        %p336 = pneg %p100
        %p337 = pneg %p129
        %p338 = pneg %p126
        %p339 = scmp.lt.s32.totalorder %s19, 1
        %s340 = scalar_select %p339, %s19, 1
        %s341 = smul.addr %s340, 8
        %s342 = scalar_lea.vmem %s3, %s341
        %s343 = smul.u32 %s19, 2
        %s344 = sadd.s32 %s343, %s20
        %s345 = smul.u32 %s19, 2
        %s346 = sadd.s32 %s345, %s20
        %p347 = scmp.lt.s32.totalorder %s19, 1
        %s348 = scalar_select %p347, %s19, 1
        %s349 = smul.addr %s348, 8
        %s350 = scalar_lea.vmem %s3, %s349
        %s351 = smul.u32 %s19, 2
        %s352 = sadd.s32 %s351, %s20
        %p353 = scmp.eq.s32.totalorder %s20, 0
        // Predicated region
        $region113: #{yolo_loss.1} parent=99 // pred_check
          %p354 = pneg %p353
        $region114: #{yolo_loss.1} parent=99 // pred_check_branch
          %356 = sbr.rel (%p354) target = $region116
        $region115: #{yolo_loss.1} parent=99 // pred_region
          %357 = vst [vmem:[#allocation2] sm:$0xff] 0.0
          %358 = vst [vmem:[#allocation2 + $0x8] sm:$0xff] 0.0
          %359 = vst [vmem:[#allocation2 + $0x10] sm:$0xff] 0.0
          %360 = vst [vmem:[#allocation2 + $0x18] sm:$0xff] 0.0
          %361 = vst [vmem:[#allocation2 + $0x20] sm:$0xff] 0.0
          %362 = vst [vmem:[#allocation2 + $0x28] sm:$0xff] 0.0
          %363 = vst [vmem:[#allocation2 + $0x30] sm:$0xff] 0.0
          %364 = vst [vmem:[#allocation2 + $0x38] sm:$0xff] 0.0
        $region116: #{yolo_loss.1} parent=99 // pred_fallthru
          _
        %s365 = smul.u32 %s352, 1024
        %v366 = vlaneseq
        %v367 = vshrl.u32 %v366, 7
        %v368 = vmul.u32 %v367, 128
        %v369 = vstv %s365
        %v370 = vadd.s32 %v369, %v368
        %v371 = vlaneseq
        %v372 = vand.u32 %v371, 127
        %v373 = vadd.s32 %v370, %v372
        %vm374 = vcmp.lt.s32.totalorder %v373, 4056
        %s375 = sld [smem:[#allocation3]]
        %v376 = vstv %s375
        %s377 = sld [smem:[#allocation3 + $0x1]]
        %v378 = vstv %s377
        %vm379 = vcmp.ge.s32.totalorder %v373, 1352
        %s380 = sld [smem:[#allocation3 + $0x80]]
        %v381 = vstv %s380
        %v382 = vsel %vm379, %v381, %v376
        %s383 = sld [smem:[#allocation3 + $0x81]]
        %v384 = vstv %s383
        %v385 = vsel %vm379, %v384, %v378
        %vm386 = vcmp.ge.s32.totalorder %v373, 2704
        %s387 = sld [smem:[#allocation3 + $0x100]]
        %v388 = vstv %s387
        %v389 = vsel %vm386, %v388, %v382
        %s390 = sld [smem:[#allocation3 + $0x101]]
        %v391 = vstv %s390
        %v392 = vsel %vm386, %v391, %v385
        %v393 = vld [vmem:[%s318] sm:$0xff]
        %vm394 = vcmp.eq.f32.partialorder %v393, 1.0
        %vm395 = vmand %vm374, %vm394
        %vm396 = vcmp.eq.f32.partialorder %v393, 0.0
        %vm397 = vmand %vm374, %vm396
        %v398 = vld [vmem:[%s311] sm:$0xff]
        %v399 = vand.u32 2147483647, %v398
        %v400 = vsub.f32 0.0, %v399
        %v401 = vmul.f32 %v400, 1.442695
        %v402 = vpow.pop %v401
        %v403 = vmax.f32 %v398, 0.0
        %v404 = vadd.f32 %v402, 1.0
        %v405 = vlog2.pop %v404
        %v406 = vmul.f32 %v405, 0.6931472
        %v407 = vmul.f32 -0.5, %v402
        %v408 = vadd.f32 %v407, 1.0
        %v409 = vmul.f32 %v408, %v402
        %v410 = vand.u32 2147483647, %v402
        %vm411 = vcmp.lt.f32.partialorder %v410, 0.0004427343
        %v412 = vsel %vm411, %v409, %v406
        %v413 = vadd.f32 %v403, %v412
        %v414 = vsel %vm397, %v413, 0.0
        %v415 = vadd.f32 %v402, 1.0
        %v416 = vrcp.pop %v415
        %vm417 = vcmp.ge.f32.partialorder %v398, 0.0
        %v418 = vmul.f32 %v402, %v416
        %v419 = vsel %vm417, %v416, %v418
        %s420 = scalar_lea.vmem %s311, 8 [#allocation5]
        %v421 = vld [vmem:[%s420] sm:$0xff]
        %v422 = vxor.u32 %v421, 2147483648
        %v423 = vmul.f32 %v422, 1.442695
        %v424 = vpow.pop %v423
        %v425 = vadd.f32 %v424, 1.0
        %v426 = vrcp.pop %v425
        %v427 = vmul.f32 1.0, %v426
        %s428 = scalar_lea.vmem %s311, 16 [#allocation5]
        %v429 = vld [vmem:[%s428] sm:$0xff]
        %v430 = vxor.u32 %v429, 2147483648
        %v431 = vmul.f32 %v430, 1.442695
        %v432 = vpow.pop %v431
        %v433 = vadd.f32 %v432, 1.0
        %v434 = vrcp.pop %v433
        %v435 = vmul.f32 1.0, %v434
        %s436 = scalar_lea.vmem %s311, 24 [#allocation5]
        %v437 = vld [vmem:[%s436] sm:$0xff]
        %s438 = scalar_lea.vmem %s311, 32 [#allocation5]
        %v439 = vld [vmem:[%s438] sm:$0xff]
        %v440 = vmul.f32 %v437, 1.442695
        %v441 = vpow.pop %v440
        %v442 = vmul.f32 %v441, %v389
        %v443 = vmul.f32 %v439, 1.442695
        %v444 = vpow.pop %v443
        %v445 = vmul.f32 %v444, %v392
        %s446 = scalar_lea.vmem %s318, 8 [#allocation6]
        %v447 = vld [vmem:[%s446] sm:$0xff]
        %s448 = scalar_lea.vmem %s318, 16 [#allocation6]
        %v449 = vld [vmem:[%s448] sm:$0xff]
        %s450 = scalar_lea.vmem %s318, 24 [#allocation6]
        %v451 = vld [vmem:[%s450] sm:$0xff]
        %s452 = scalar_lea.vmem %s318, 32 [#allocation6]
        %v453 = vld [vmem:[%s452] sm:$0xff]
        %v454 = vmul.f32 %v442, 0.5
        %v455 = vsub.f32 %v427, %v454
        %v456 = vadd.f32 %v427, %v454
        %v457 = vmul.f32 %v445, 0.5
        %v458 = vsub.f32 %v435, %v457
        %v459 = vadd.f32 %v435, %v457
        %v460 = vmul.f32 %v451, 0.5
        %v461 = vsub.f32 %v447, %v460
        %v462 = vadd.f32 %v447, %v460
        %v463 = vmul.f32 %v453, 0.5
        %v464 = vsub.f32 %v449, %v463
        %v465 = vadd.f32 %v449, %v463
        %v466 = vmin.f32 %v456, %v462
        %v467 = vmax.f32 %v455, %v461
        %v468 = vsub.f32 %v466, %v467
        %v469 = vmax.f32 %v468, 0.0
        %v470 = vmin.f32 %v459, %v465
        %v471 = vmax.f32 %v458, %v464
        %v472 = vsub.f32 %v470, %v471
        %v473 = vmax.f32 %v472, 0.0
        %v474 = vmul.f32 %v469, %v473
        %v475 = vsub.f32 %v456, %v455
        %v476 = vsub.f32 %v459, %v458
        %v477 = vmul.f32 %v475, %v476
        %v478 = vand.u32 2147483647, %v477
        %v479 = vsub.f32 %v462, %v461
        %v480 = vsub.f32 %v465, %v464
        %v481 = vmul.f32 %v479, %v480
        %v482 = vand.u32 2147483647, %v481
        %v483 = vadd.f32 %v478, %v482
        %v484 = vsub.f32 %v483, %v474
        %v485 = vadd.f32 %v484, 1e-06
        %v486 = vrcp.pop %v485
        %v487 = vmul.f32 %v474, %v486
        %v488 = vmul.f32 %v487, %v393
        %v489 = vsub.f32 %v419, %v488
        %v490 = vmul.f32 %v489, %v489
        %v491 = vsel %vm395, %v490, 0.0
        %v492 = vrcp.pop %v389
        %v493 = vmul.f32 %v451, %v492
        %v494 = vadd.f32 %v493, 1e-16
        %v495 = vlog2.pop %v494
        %v496 = vmul.f32 %v495, 0.6931472
        %v497 = vrcp.pop %v392
        %v498 = vmul.f32 %v453, %v497
        %v499 = vadd.f32 %v498, 1e-16
        %v500 = vlog2.pop %v499
        %v501 = vmul.f32 %v500, 0.6931472
        %v502 = vsub.f32 %v427, %v447
        %v503 = vmul.f32 %v502, %v502
        %v504 = vsub.f32 %v435, %v449
        %v505 = vmul.f32 %v504, %v504
        %v506 = vadd.f32 %v503, %v505
        %v507 = vsub.f32 %v437, %v496
        %v508 = vmul.f32 %v507, %v507
        %v509 = vadd.f32 %v506, %v508
        %v510 = vsub.f32 %v439, %v501
        %v511 = vmul.f32 %v510, %v510
        %v512 = vadd.f32 %v509, %v511
        %v513 = vsel %vm395, %v512, 0.0
        %s514 = scalar_lea.vmem %s318, 40 [#allocation6]
        %v515 = vld [vmem:[%s514] sm:$0xff]
        %v516 = vcvt.f32.s32.to.zero.pseudo %v515
        %s517 = scalar_lea.vmem %s311, 40 [#allocation5]
        %v518 = vld [vmem:[%s517] sm:$0xff]
        %s519 = scalar_lea.vmem %s311, 48 [#allocation5]
        %v520 = vld [vmem:[%s519] sm:$0xff]
        %v521 = vmax.f32 %v518, %v520
        %s522 = scalar_lea.vmem %s311, 56 [#allocation5]
        %v523 = vld [vmem:[%s522] sm:$0xff]
        %v524 = vmax.f32 %v521, %v523
        %s525 = scalar_lea.vmem %s311, 64 [#allocation5]
        %v526 = vld [vmem:[%s525] sm:$0xff]
        %v527 = vmax.f32 %v524, %v526
        %v528 = vsub.f32 %v518, %v527
        %v529 = vmul.f32 %v528, 1.442695
        %v530 = vpow.pop %v529
        %v531 = vadd.f32 %v530, 0.0
        %vm532 = vcmp.eq.s32.totalorder %v516, 0
        %v533 = vsel %vm532, %v518, 0.0
        %v534 = vadd.f32 %v533, 0.0
        %v535 = vsub.f32 %v520, %v527
        %v536 = vmul.f32 %v535, 1.442695
        %v537 = vpow.pop %v536
        %v538 = vadd.f32 %v531, %v537
        %vm539 = vcmp.eq.s32.totalorder %v516, 1
        %v540 = vsel %vm539, %v520, 0.0
        %v541 = vadd.f32 %v534, %v540
        %v542 = vsub.f32 %v523, %v527
        %v543 = vmul.f32 %v542, 1.442695
        %v544 = vpow.pop %v543
        %v545 = vadd.f32 %v538, %v544
        %vm546 = vcmp.eq.s32.totalorder %v516, 2
        %v547 = vsel %vm546, %v523, 0.0
        %v548 = vadd.f32 %v541, %v547
        %v549 = vsub.f32 %v526, %v527
        %v550 = vmul.f32 %v549, 1.442695
        %v551 = vpow.pop %v550
        %v552 = vadd.f32 %v545, %v551
        %vm553 = vcmp.eq.s32.totalorder %v516, 3
        %v554 = vsel %vm553, %v526, 0.0
        %v555 = vadd.f32 %v548, %v554
        %v556 = vlog2.pop %v552
        %v557 = vmul.f32 %v556, 0.6931472
        %v558 = vadd.f32 %v527, %v557
        %v559 = vsub.f32 %v558, %v555
        %v560 = vsel %vm395, %v559, 0.0
        %v561 = vld [vmem:[#allocation2] sm:$0xff]
        %v562 = vadd.f32 %v561, %v414
        %563 = vst [vmem:[#allocation2] sm:$0xff] %v562
        %s564 = scalar_lea.vmem [#allocation2], 8
        %v565 = vld [vmem:[%s564] sm:$0xff]
        %v566 = vsel %vm397, 1, 0
        %v567 = vcvt.s32.f32 %v566
        %v568 = vadd.f32 %v565, %v567
        %569 = vst [vmem:[%s564] sm:$0xff] %v568
        %s570 = scalar_lea.vmem [#allocation2], 16
        %v571 = vld [vmem:[%s570] sm:$0xff]
        %v572 = vsel %vm395, 1, 0
        %v573 = vcvt.s32.f32 %v572
        %v574 = vadd.f32 %v571, %v573
        %575 = vst [vmem:[%s570] sm:$0xff] %v574
        %s576 = scalar_lea.vmem [#allocation2], 24
        %v577 = vld [vmem:[%s576] sm:$0xff]
        %v578 = vadd.f32 %v577, %v491
        %579 = vst [vmem:[%s576] sm:$0xff] %v578
        %s580 = scalar_lea.vmem [#allocation2], 32
        %v581 = vld [vmem:[%s580] sm:$0xff]
        %v582 = vadd.f32 %v581, %v513
        %583 = vst [vmem:[%s580] sm:$0xff] %v582
        %s584 = scalar_lea.vmem [#allocation2], 40
        %v585 = vld [vmem:[%s584] sm:$0xff]
        %v586 = vadd.f32 %v585, %v560
        %587 = vst [vmem:[%s584] sm:$0xff] %v586
        %p588 = scmp.eq.s32.totalorder %s20, 1
        // Predicated region
        $region117: #{yolo_loss.1} parent=99 // pred_check
          %p589 = pneg %p588
        $region118: #{yolo_loss.1} parent=99 // pred_check_branch
          %591 = sbr.rel (%p589) target = $region120
        $region119: #{yolo_loss.1} parent=99 // pred_region
          %v592 = vld [vmem:[#allocation2] sm:$0xff]
          %v593 = vrot.slane %v592, 4
          %v594 = vadd.f32 %v592, %v593
          %v595 = vrot.slane %v594, 2
          %v596 = vadd.f32 %v594, %v595
          %v597 = vrot.slane %v596, 1
          %v598 = vadd.f32 %v596, %v597
          %v599 = vld [vmem:[%s564] sm:$0xff]
          %v600 = vrot.slane %v599, 4
          %v601 = vadd.f32 %v599, %v600
          %v602 = vrot.slane %v601, 2
          %v603 = vadd.f32 %v601, %v602
          %v604 = vrot.slane %v603, 1
          %v605 = vadd.f32 %v603, %v604
          %v606 = vld [vmem:[%s570] sm:$0xff]
          %v607 = vrot.slane %v606, 4
          %v608 = vadd.f32 %v606, %v607
          %v609 = vrot.slane %v608, 2
          %v610 = vadd.f32 %v608, %v609
          %v611 = vrot.slane %v610, 1
          %v612 = vadd.f32 %v610, %v611
          %v613 = vld [vmem:[%s576] sm:$0xff]
          %v614 = vrot.slane %v613, 4
          %v615 = vadd.f32 %v613, %v614
          %v616 = vrot.slane %v615, 2
          %v617 = vadd.f32 %v615, %v616
          %v618 = vrot.slane %v617, 1
          %v619 = vadd.f32 %v617, %v618
          %v620 = vld [vmem:[%s580] sm:$0xff]
          %v621 = vrot.slane %v620, 4
          %v622 = vadd.f32 %v620, %v621
          %v623 = vrot.slane %v622, 2
          %v624 = vadd.f32 %v622, %v623
          %v625 = vrot.slane %v624, 1
          %v626 = vadd.f32 %v624, %v625
          %v627 = vld [vmem:[%s584] sm:$0xff]
          %v628 = vrot.slane %v627, 4
          %v629 = vadd.f32 %v627, %v628
          %v630 = vrot.slane %v629, 2
          %v631 = vadd.f32 %v629, %v630
          %v632 = vrot.slane %v631, 1
          %v633 = vadd.f32 %v631, %v632
          %s634 = scalar_lea.vmem [#allocation2], 48
          %v635 = vld [vmem:[%s634] sm:$0xff]
          %v636 = vrot.slane %v635, 4
          %v637 = vadd.f32 %v635, %v636
          %v638 = vrot.slane %v637, 2
          %v639 = vadd.f32 %v637, %v638
          %v640 = vrot.slane %v639, 1
          %v641 = vadd.f32 %v639, %v640
          %s642 = scalar_lea.vmem [#allocation2], 56
          %v643 = vld [vmem:[%s642] sm:$0xff]
          %v644 = vrot.slane %v643, 4
          %v645 = vadd.f32 %v643, %v644
          %v646 = vrot.slane %v645, 2
          %v647 = vadd.f32 %v645, %v646
          %v648 = vrot.slane %v647, 1
          %v649 = vadd.f32 %v647, %v648
          %vm650 = vcmask 1040384
          %v651 = vsel %vm650, %v598, %v605
          %vm652 = vcmask 1041408
          %v653 = vsel %vm652, %v651, %v612
          %vm654 = vcmask 1042432
          %v655 = vsel %vm654, %v653, %v619
          %vm656 = vcmask 1043456
          %v657 = vsel %vm656, %v655, %v626
          %vm658 = vcmask 1044480
          %v659 = vsel %vm658, %v657, %v633
          %vm660 = vcmask 1045504
          %v661 = vsel %vm660, %v659, %v641
          %vm662 = vcmask 1046528
          %v663 = vsel %vm662, %v661, %v649
          %664 = vst [vmem:[%s350] sm:$0xff] %v663
        $region120: #{yolo_loss.1} parent=99 // pred_fallthru
          _
        %p665 = scmp.lt.s32.totalorder %s19, 1
        %s666 = scalar_select %p665, %s19, 1
        %s667 = smul.addr %s666, 8
        %s668 = scalar_lea.vmem %s3, %s667
        // Predicated region
        $region121: #{yolo_loss.1} parent=99 // pred_check
          %p669 = pneg %p126
        $region122: #{yolo_loss.1} parent=99 // pred_check_branch
          %671 = sbr.rel (%p669) target = $region124
        $region123: #{yolo_loss.1} parent=99 // pred_region
          _
        $region124: #{yolo_loss.1} parent=99 // pred_fallthru
          _
      $region100: #{yolo_loss.1} parent=5 // pred_fallthru
        _
      %p672 = scmp.le.s32.totalorder 2, %s10
      // Predicated region
      $region125: #{yolo_loss.1} parent=5 // pred_check
        %p673 = pneg %p672
      $region126: #{yolo_loss.1} parent=5 // pred_check_branch
        %675 = sbr.rel (%p673) target = $region128
      $region127: #{yolo_loss.1} parent=5 // pred_region
        %s676 = ssub.s32 %s10, 2
        // Predicated region
        $region129: #{yolo_loss.1} parent=127 // pred_check
          %p677 = pneg %p132
        $region130: #{yolo_loss.1} parent=127 // pred_check_branch
          %679 = sbr.rel (%p677) target = $region132
        $region131: #{yolo_loss.1} parent=127 // pred_region
          %p680 = scmp.lt.s32.totalorder %s21, 1
          %s681 = scalar_select %p680, %s21, 1
          %s682 = smul.addr %s681, 8
          %s683 = scalar_lea.vmem %s3, %s682
        $region132: #{yolo_loss.1} parent=127 // pred_fallthru
          _
      $region128: #{yolo_loss.1} parent=5 // pred_fallthru
        _
    $region6: #{yolo_loss.1} parent=1 // loop_footer
      %s14 = sadd.s32 1, %s10
    $region7: #{yolo_loss.1} parent=1 // loop_footer_branch
      %9 = sbr.rel target = $region3
    $region8: #{yolo_loss.1} parent=1 // loop_exit
      _
    %684 = vsyncpa [#allocation4], 1
    %s685 = scalar_lea.sflag [#allocation4], 1
    %686 = vsyncpa %s685, 1

</llo_original>
